<compile_context>
chip_gen: v5e
topology: v5e:2x2
jax: 0.10.0
libtpu: 0.0.40
codegen_flags: <defaults>
</compile_context>

<pallas_src>
import functools

import jax
import jax.numpy as jnp
from jax import lax
from jax.experimental import pallas as pl
from jax.experimental.pallas import tpu as pltpu

EPS = 1e-5
D1 = 512   # lane-padded 500
D2 = 256   # lane-padded 250
HP = jax.lax.Precision.HIGHEST


# ---------------------------------------------------------------------------
# Fused kernel (one grid step = one batch block x one output-row block):
#   stride-2 conv(1->3,k=3,pad=1) + folded BN2d + ReLU + partial global-average-pool
#   -> (last spatial step only) image head (stem@_fc folded), meta MLP, output linear.
# ---------------------------------------------------------------------------
def fused_model_kernel(phases_ref, tab_ref, cw_ref, cb_ref, ob_ref,
                       head_w_ref, head_b_ref, m1w_ref, m1b_ref,
                       m2w_ref, m2b_ref, woi_ref, wot_ref,
                       o_ref, pool_ref, *, Ho, Wo, TR):
    # phases_ref : (4, TB, TR+1, Wh) VMEM block, phase[2p+q] = x_pad[:, p::2, q::2] row tile
    # tab_ref    : (TB, 4) VMEM (resident across spatial steps)
    # cw_ref     : (27,) SMEM folded conv*BN weights (c*9 + kh*3 + kw); cb_ref: (3,) SMEM bias
    # ob_ref     : (1,)  SMEM output bias
    # head_w_ref : (3,D1); head_b_ref : (1,D1)   (stem @ _fc folded, lane-padded)
    # m1w_ref    : (4,D1); m1b_ref    : (1,D1)   (BN1d folded, lane-padded)
    # m2w_ref    : (D1,D2); m2b_ref   : (1,D2)
    # woi_ref    : (1,D1); wot_ref    : (1,D2)   (output weight rows, lane-padded)
    # o_ref      : (TB, 1)
    # pool_ref   : (3, TB, 1) VMEM scratch — per-channel GAP accumulator.
    j = pl.program_id(1)
    last_j = pl.num_programs(1) - 1

    @pl.when(j == 0)
    def _init():
        pool_ref[...] = jnp.zeros_like(pool_ref)

    # ---- stride-2 3x3 conv over spatial-phase slabs.  Each (kh,kw) tap is a zero-cost Ref
    # view loaded once and reused by all 3 output channels; bias deferred to the ReLU. ----
    accs = [None, None, None]
    for kh in range(3):
        for kw in range(3):
            p, q = kh % 2, kw % 2
            oh, ow = kh // 2, kw // 2
            patch = phases_ref[2 * p + q, :, oh:oh + TR, ow:ow + Wo].astype(jnp.float32)
            for c in range(3):
                term = cw_ref[c * 9 + kh * 3 + kw] * patch
                accs[c] = term if accs[c] is None else accs[c] + term

    # Row-validity mask is only needed when the last spatial tile is partial (static check).
    if Ho % TR != 0:
        valid = jnp.minimum(TR, Ho - j * TR)
        row_ok = lax.broadcasted_iota(jnp.int32, (1, TR, 1), 1) < valid
    else:
        row_ok = None

    # ---- bias + ReLU + partial global-average-pool into the persistent accumulator. ----
    for c in range(3):
        r = jnp.maximum(accs[c] + cb_ref[c], 0.0)
        if row_ok is not None:
            r = jnp.where(row_ok, r, 0.0)
        s = jnp.sum(r, axis=2)                                           # (TB, TR)
        pool_ref[c] = pool_ref[c] + jnp.sum(s, axis=1, keepdims=True)    # (TB, 1)

    # ---- finalize on the last spatial step: head + meta MLP + output linear. ----
    @pl.when(j == last_j)
    def _finalize():
        inv_hw = 1.0 / float(Ho * Wo)
        p0 = pool_ref[0] * inv_hw
        p1 = pool_ref[1] * inv_hw
        p2 = pool_ref[2] * inv_hw

        # Image head (stem @ _fc folded): 3 broadcast FMAs on the VPU.
        x_img = (head_b_ref[...]
                 + p0 * head_w_ref[0:1, :]
                 + p1 * head_w_ref[1:2, :]
                 + p2 * head_w_ref[2:3, :])                              # (TB, D1)

        # Meta layer 1 (K=4): broadcast FMAs instead of a degenerate MXU matmul.
        t = m1b_ref[...]
        for k in range(4):
            t = t + tab_ref[:, k:k + 1] * m1w_ref[k:k + 1, :]
        t = jnp.maximum(t, 0.0)                                          # (TB, D1)

        # Meta layer 2: real matmul -> MXU.
        t = jnp.dot(t, m2w_ref[...], preferred_element_type=jnp.float32) + m2b_ref[...]
        t = jnp.maximum(t, 0.0)                                          # (TB, D2)

        # cat([x_img, t]) @ W_out + b as VPU multiply + lane reductions (N=1 is degenerate).
        o = (jnp.sum(x_img * woi_ref[...], axis=1, keepdims=True)
             + jnp.sum(t * wot_ref[...], axis=1, keepdims=True)
             + ob_ref[0])
        o_ref[...] = o


# ---------------------------------------------------------------------------
# Parameters (deterministic synthetic init)
# ---------------------------------------------------------------------------
def init_params(key):
    ks = jax.random.split(key, 12)
    p = {}
    # input conv: Conv2d(1, 3, k=3) -> weight (out=3, in=1, 3, 3); in-channel squeezed
    p['conv_w'] = jax.random.normal(ks[0], (3, 3, 3), jnp.float32) * 0.1
    p['conv_b'] = jax.random.normal(ks[1], (3,), jnp.float32) * 0.1
    # BatchNorm2d(3) (eval)
    p['bn2_gamma'] = jnp.ones((3,), jnp.float32)
    p['bn2_beta'] = jnp.zeros((3,), jnp.float32)
    p['bn2_mean'] = jnp.zeros((3,), jnp.float32)
    p['bn2_var'] = jnp.ones((3,), jnp.float32)
    # backbone surrogate stem: GAP -> Linear(3, 1536)
    p['stem_w'] = jax.random.normal(ks[2], (3, 1536), jnp.float32) * 0.05
    p['stem_b'] = jax.random.normal(ks[3], (1, 1536), jnp.float32) * 0.05
    # model._fc: Linear(1536, 500)
    p['fc_w'] = jax.random.normal(ks[4], (1536, 500), jnp.float32) * 0.02
    p['fc_b'] = jax.random.normal(ks[5], (1, 500), jnp.float32) * 0.02
    # meta: Linear(4,500)+BN1d(500)+ReLU+Dropout + Linear(500,250)+BN1d(250)+ReLU+Dropout
    p['m1_w'] = jax.random.normal(ks[6], (4, 500), jnp.float32) * 0.1
    p['m1_b'] = jax.random.normal(ks[7], (500,), jnp.float32) * 0.1
    p['bn1a_gamma'] = jnp.ones((500,), jnp.float32)
    p['bn1a_beta'] = jnp.zeros((500,), jnp.float32)
    p['bn1a_mean'] = jnp.zeros((500,), jnp.float32)
    p['bn1a_var'] = jnp.ones((500,), jnp.float32)
    p['m2_w'] = jax.random.normal(ks[8], (500, 250), jnp.float32) * 0.05
    p['m2_b'] = jax.random.normal(ks[9], (250,), jnp.float32) * 0.05
    p['bn1b_gamma'] = jnp.ones((250,), jnp.float32)
    p['bn1b_beta'] = jnp.zeros((250,), jnp.float32)
    p['bn1b_mean'] = jnp.zeros((250,), jnp.float32)
    p['bn1b_var'] = jnp.ones((250,), jnp.float32)
    # output: Linear(500 + 250, 1)
    p['out_w'] = jax.random.normal(ks[10], (750, 1), jnp.float32) * 0.05
    p['out_b'] = jax.random.normal(ks[11], (1, 1), jnp.float32) * 0.05
    return p


# ---------------------------------------------------------------------------
# Forward wrapper: trace-time folds + lane padding + tiled single pallas_call.
# ---------------------------------------------------------------------------
def model_forward(params, x, tab, *, batch_block=8, row_block_bytes=2 << 20,
                  phase_dtype=jnp.float32):
    # x: (B, 1, H, W) float32 (NCHW), tab: (B, 4) float32
    B, cin, H, W = x.shape
    assert cin == 1 and tab.shape == (B, 4)

    # ---- fold BatchNorm2d (eval) into the conv ----
    bn_s = params['bn2_gamma'] / jnp.sqrt(params['bn2_var'] + EPS)
    w_eff = (params['conv_w'] * bn_s[:, None, None]).reshape(-1)                    # (27,)
    b_eff = (params['conv_b'] - params['bn2_mean']) * bn_s + params['bn2_beta']     # (3,)

    # ---- fold surrogate stem into _fc: (3,1536)@(1536,500) -> single (3,500) affine ----
    head_w = jnp.dot(params['stem_w'], params['fc_w'], precision=HP)                # (3, 500)
    head_b = jnp.dot(params['stem_b'], params['fc_w'], precision=HP) + params['fc_b']

    # ---- fold BatchNorm1d (eval) into the meta linears ----
    s1 = params['bn1a_gamma'] / jnp.sqrt(params['bn1a_var'] + EPS)
    w1 = params['m1_w'] * s1[None, :]
    b1 = ((params['m1_b'] - params['bn1a_mean']) * s1 + params['bn1a_beta'])[None, :]
    s2 = params['bn1b_gamma'] / jnp.sqrt(params['bn1b_var'] + EPS)
    w2 = params['m2_w'] * s2[None, :]
    b2 = ((params['m2_b'] - params['bn1b_mean']) * s2 + params['bn1b_beta'])[None, :]

    # ---- zero-pad lane dims to multiples of 128 (exact: pads feed zeros everywhere) ----
    head_w = jnp.pad(head_w, ((0, 0), (0, D1 - 500)))
    head_b = jnp.pad(head_b, ((0, 0), (0, D1 - 500)))
    w1 = jnp.pad(w1, ((0, 0), (0, D1 - 500)))
    b1 = jnp.pad(b1, ((0, 0), (0, D1 - 500)))
    w2 = jnp.pad(w2, ((0, D1 - 500), (0, D2 - 250)))
    b2 = jnp.pad(b2, ((0, 0), (0, D2 - 250)))
    wo_img = jnp.pad(params['out_w'][:500].T, ((0, 0), (0, D1 - 500)))               # (1, D1)
    wo_tab = jnp.pad(params['out_w'][500:].T, ((0, 0), (0, D2 - 250)))               # (1, D2)
    out_b = params['out_b'].reshape(-1)                                              # (1,)

    # ---- batch tiling (pad batch to a multiple of the block) ----
    TB = B if B <= batch_block else batch_block
    if B > batch_block:
        assert batch_block % 8 == 0, "batch_block must be a multiple of 8"
    B_pad = -(-B // TB) * TB
    if B_pad != B:
        x = jnp.pad(x, ((0, B_pad - B), (0, 0), (0, 0), (0, 0)))
        tab = jnp.pad(tab, ((0, B_pad - B), (0, 0)))

    # conv(k=3, pad=1, stride=2) output size
    Ho, Wo = (H + 1) // 2, (W + 1) // 2
    Hh, Wh = Ho + 1, Wo + 1

    # ---- spatial phase decomposition of the padded input (XLA glue).
    # Right/bottom zero-pad to even H/W so all 4 phase slabs have equal shape; exact because
    # the extra row/col only extends the conv's own zero padding.
    xp = jnp.pad(x[:, 0], ((0, 0), (1, 1 + H % 2), (1, 1 + W % 2)))
    phases = jnp.stack([xp[:, p::2, q::2] for p in (0, 1) for q in (0, 1)])          # (4,Bp,Hh,Wh)

    # ---- output-row tiling with a duplicated 1-row halo per tile (non-overlapping blocks) ----
    itemsize = jnp.dtype(phase_dtype).itemsize
    row_bytes = 4 * TB * Wh * itemsize
    TR_cap = max(1, int(row_block_bytes // row_bytes))
    TR = Ho if Ho <= TR_cap else TR_cap
    nrt = -(-Ho // TR)
    rows_needed = nrt * TR + 1
    if rows_needed > Hh:
        phases = jnp.pad(phases, ((0, 0), (0, 0), (0, rows_needed - Hh), (0, 0)))
    row_idx = jnp.arange(nrt)[:, None] * TR + jnp.arange(TR + 1)[None, :]            # (nrt,TR+1)
    phases_tiled = phases[:, :, row_idx, :].astype(phase_dtype)                      # (4,Bp,nrt,TR+1,Wh)

    grid = (B_pad // TB, nrt)

    # VMEM budget: double-buffered phases block + resident folded weights + headroom.
    phases_blk = 4 * TB * (TR + 1) * Wh * itemsize
    weight_bytes = 4 * (3 * D1 + D1 + 4 * D1 + D1 + D1 * D2 + D2 + D1 + D2)
    vmem_limit = int(min(max(4 * phases_blk + 2 * weight_bytes + (4 << 20), 32 << 20), 48 << 20))

    kern = functools.partial(fused_model_kernel, Ho=Ho, Wo=Wo, TR=TR)
    smem = pl.BlockSpec(memory_space=pltpu.SMEM)
    out = pl.pallas_call(
        kern,
        out_shape=jax.ShapeDtypeStruct((B_pad, 1), jnp.float32),
        grid=grid,
        in_specs=[
            pl.BlockSpec((4, TB, None, TR + 1, Wh), lambda i, j: (0, i, j, 0, 0)),   # phases tile
            pl.BlockSpec((TB, 4), lambda i, j: (i, 0)),                              # tab block
            smem, smem, smem,                                                        # cw, cb, ob
            pl.BlockSpec((3, D1), lambda i, j: (0, 0)),                              # head_w
            pl.BlockSpec((1, D1), lambda i, j: (0, 0)),                              # head_b
            pl.BlockSpec((4, D1), lambda i, j: (0, 0)),                              # m1_w
            pl.BlockSpec((1, D1), lambda i, j: (0, 0)),                              # m1_b
            pl.BlockSpec((D1, D2), lambda i, j: (0, 0)),                             # m2_w
            pl.BlockSpec((1, D2), lambda i, j: (0, 0)),                              # m2_b
            pl.BlockSpec((1, D1), lambda i, j: (0, 0)),                              # wo_img
            pl.BlockSpec((1, D2), lambda i, j: (0, 0)),                              # wo_tab
        ],
        out_specs=pl.BlockSpec((TB, 1), lambda i, j: (i, 0)),
        scratch_shapes=[pltpu.VMEM((3, TB, 1), jnp.float32)],
        compiler_params=pltpu.CompilerParams(
            dimension_semantics=("parallel", "arbitrary"),
            vmem_limit_bytes=vmem_limit),
    )(phases_tiled, tab, w_eff, b_eff, out_b,
      head_w, head_b, w1, b1, w2, b2, wo_img, wo_tab)
    return out[:B]


# ---------------------------------------------------------------------------
# Pure-JAX reference (same surrogate semantics) for a numerical sanity check.
# ---------------------------------------------------------------------------
def reference_forward(params, x, tab):
    bn_s = params['bn2_gamma'] / jnp.sqrt(params['bn2_var'] + EPS)
    y = lax.conv_general_dilated(x, params['conv_w'][:, None, :, :], (2, 2),
                                 ((1, 1), (1, 1)),
                                 dimension_numbers=('NCHW', 'OIHW', 'NCHW'),
                                 precision=HP)
    y = y + params['conv_b'][None, :, None, None]
    y = ((y - params['bn2_mean'][None, :, None, None]) * bn_s[None, :, None, None]
         + params['bn2_beta'][None, :, None, None])
    y = jnp.maximum(y, 0.0)
    pooled = y.mean(axis=(2, 3))                                                     # (B, 3)
    x_img = jnp.dot(jnp.dot(pooled, params['stem_w'], precision=HP) + params['stem_b'],
                    params['fc_w'], precision=HP) + params['fc_b']
    s1 = params['bn1a_gamma'] / jnp.sqrt(params['bn1a_var'] + EPS)
    t = jnp.dot(tab, params['m1_w'], precision=HP) + params['m1_b']
    t = (t - params['bn1a_mean']) * s1 + params['bn1a_beta']
    t = jnp.maximum(t, 0.0)
    s2 = params['bn1b_gamma'] / jnp.sqrt(params['bn1b_var'] + EPS)
    t = jnp.dot(t, params['m2_w'], precision=HP) + params['m2_b']
    t = (t - params['bn1b_mean']) * s2 + params['bn1b_beta']
    t = jnp.maximum(t, 0.0)
    return jnp.dot(jnp.concatenate([x_img, t], axis=1), params['out_w'],
                   precision=HP) + params['out_b']


if __name__ == "__main__":
    key = jax.random.PRNGKey(0)
    pkey, xkey, tkey = jax.random.split(key, 3)
    params = init_params(pkey)

    x = jax.random.normal(xkey, (2, 1, 16, 16), jnp.float32)   # (B, C=1, H, W)
    tab = jax.random.normal(tkey, (2, 4), jnp.float32)         # (B, 4) tabular metadata

    fwd = jax.jit(functools.partial(model_forward, params))
    out = fwd(x, tab)
    jax.block_until_ready(out)
    assert out.shape == (2, 1) and out.dtype == jnp.float32

    ref = reference_forward(params, x, tab)
    err = float(jnp.max(jnp.abs(out - ref)))
    tol = 1e-2 * (1.0 + float(jnp.max(jnp.abs(ref))))
    assert err <= tol, f"kernel vs reference mismatch: max abs err {err} > {tol}"
    print("KERNEL_OK")
</pallas_src>

<mosaic_0001>
module attributes {stable_mosaic.version = 11 : i64} {
  func.func @fused_model_kernel(%arg0: i32, %arg1: i32, %arg2: memref<4x2x1x9x9xf32, #tpu.memory_space<vmem>>, %arg3: memref<2x4xf32, #tpu.memory_space<vmem>>, %arg4: memref<27xf32, #tpu.memory_space<smem>>, %arg5: memref<3xf32, #tpu.memory_space<smem>>, %arg6: memref<1xf32, #tpu.memory_space<smem>>, %arg7: memref<3x512xf32, #tpu.memory_space<vmem>>, %arg8: memref<1x512xf32, #tpu.memory_space<vmem>>, %arg9: memref<4x512xf32, #tpu.memory_space<vmem>>, %arg10: memref<1x512xf32, #tpu.memory_space<vmem>>, %arg11: memref<512x256xf32, #tpu.memory_space<vmem>>, %arg12: memref<1x256xf32, #tpu.memory_space<vmem>>, %arg13: memref<1x512xf32, #tpu.memory_space<vmem>>, %arg14: memref<1x256xf32, #tpu.memory_space<vmem>>, %arg15: memref<2x1xf32, #tpu.memory_space<vmem>>, %arg16: memref<3x2x1xf32, #tpu.memory_space<vmem>>) attributes {dimension_semantics = [#tpu.dimension_semantics<parallel>, #tpu.dimension_semantics<arbitrary>], iteration_bounds = array<i64: 1, 1>, scalar_prefetch = 0 : i64, scratch_operands = 1 : i64, tpu.core_type = #tpu.core_type<tc>, window_params = [{transform_indices = @transform_0, window_bounds = array<i64: 4, 2, 1, 9, 9>}, {transform_indices = @transform_1, window_bounds = array<i64: 2, 4>}, {transform_indices = @transform_2, window_bounds = array<i64: 27>}, {transform_indices = @transform_3, window_bounds = array<i64: 3>}, {transform_indices = @transform_4, window_bounds = array<i64: 1>}, {pipeline_mode = #tpu.pipeline_mode<synchronous>, transform_indices = @transform_5, window_bounds = array<i64: 3, 512>}, {pipeline_mode = #tpu.pipeline_mode<synchronous>, transform_indices = @transform_6, window_bounds = array<i64: 1, 512>}, {pipeline_mode = #tpu.pipeline_mode<synchronous>, transform_indices = @transform_7, window_bounds = array<i64: 4, 512>}, {pipeline_mode = #tpu.pipeline_mode<synchronous>, transform_indices = @transform_8, window_bounds = array<i64: 1, 512>}, {pipeline_mode = #tpu.pipeline_mode<synchronous>, transform_indices = @transform_9, window_bounds = array<i64: 512, 256>}, {pipeline_mode = #tpu.pipeline_mode<synchronous>, transform_indices = @transform_10, window_bounds = array<i64: 1, 256>}, {pipeline_mode = #tpu.pipeline_mode<synchronous>, transform_indices = @transform_11, window_bounds = array<i64: 1, 512>}, {pipeline_mode = #tpu.pipeline_mode<synchronous>, transform_indices = @transform_12, window_bounds = array<i64: 1, 256>}, {transform_indices = @transform_13, window_bounds = array<i64: 2, 1>}]} {
    %c0_i32 = arith.constant 0 : i32
    %0 = arith.cmpi eq, %arg1, %c0_i32 : i32
    %1 = arith.extui %0 : i1 to i32
    %c0_i32_0 = arith.constant 0 : i32
    %2 = arith.cmpi ne, %1, %c0_i32_0 : i32
    scf.if %2 {
      %cst_77 = arith.constant 0.000000e+00 : f32
      %171 = vector.broadcast %cst_77 : f32 to vector<3x2x1xf32>
      %c0_78 = arith.constant 0 : index
      %c0_79 = arith.constant 0 : index
      %c0_80 = arith.constant 0 : index
      %172 = vector.load %arg16[%c0_78, %c0_79, %c0_80] : memref<3x2x1xf32, #tpu.memory_space<vmem>>, vector<3x2x1xf32>
      tpu.vector_store %arg16[%c0_78, %c0_79, %c0_80], %171 {strides = array<i32>} : memref<3x2x1xf32, #tpu.memory_space<vmem>>, vector<3x2x1xf32>,
    } else {
    }
    %c0 = arith.constant 0 : index
    %c0_1 = arith.constant 0 : index
    %c0_2 = arith.constant 0 : index
    %c0_3 = arith.constant 0 : index
    %c0_4 = arith.constant 0 : index
    %3 = vector.load %arg2[%c0, %c0_1, %c0_2, %c0_3, %c0_4] : memref<4x2x1x9x9xf32, #tpu.memory_space<vmem>>, vector<1x2x1x8x8xf32>
    %4 = vector.shape_cast %3 : vector<1x2x1x8x8xf32> to vector<2x8x8xf32>
    %c0_5 = arith.constant 0 : index
    %5 = memref.load %arg4[%c0_5] : memref<27xf32, #tpu.memory_space<smem>>
    %6 = vector.broadcast %5 : f32 to vector<2x8x8xf32>
    %7 = arith.mulf %6, %4 : vector<2x8x8xf32>
    %c9 = arith.constant 9 : index
    %8 = memref.load %arg4[%c9] : memref<27xf32, #tpu.memory_space<smem>>
    %9 = vector.broadcast %8 : f32 to vector<2x8x8xf32>
    %10 = arith.mulf %9, %4 : vector<2x8x8xf32>
    %c18 = arith.constant 18 : index
    %11 = memref.load %arg4[%c18] : memref<27xf32, #tpu.memory_space<smem>>
    %12 = vector.broadcast %11 : f32 to vector<2x8x8xf32>
    %13 = arith.mulf %12, %4 : vector<2x8x8xf32>
    %c1 = arith.constant 1 : index
    %c0_6 = arith.constant 0 : index
    %c0_7 = arith.constant 0 : index
    %c0_8 = arith.constant 0 : index
    %c0_9 = arith.constant 0 : index
    %14 = vector.load %arg2[%c1, %c0_6, %c0_7, %c0_8, %c0_9] : memref<4x2x1x9x9xf32, #tpu.memory_space<vmem>>, vector<1x2x1x8x8xf32>
    %15 = vector.shape_cast %14 : vector<1x2x1x8x8xf32> to vector<2x8x8xf32>
    %c1_10 = arith.constant 1 : index
    %16 = memref.load %arg4[%c1_10] : memref<27xf32, #tpu.memory_space<smem>>
    %17 = vector.broadcast %16 : f32 to vector<2x8x8xf32>
    %18 = arith.mulf %17, %15 : vector<2x8x8xf32>
    %19 = arith.addf %7, %18 : vector<2x8x8xf32>
    %c10 = arith.constant 10 : index
    %20 = memref.load %arg4[%c10] : memref<27xf32, #tpu.memory_space<smem>>
    %21 = vector.broadcast %20 : f32 to vector<2x8x8xf32>
    %22 = arith.mulf %21, %15 : vector<2x8x8xf32>
    %23 = arith.addf %10, %22 : vector<2x8x8xf32>
    %c19 = arith.constant 19 : index
    %24 = memref.load %arg4[%c19] : memref<27xf32, #tpu.memory_space<smem>>
    %25 = vector.broadcast %24 : f32 to vector<2x8x8xf32>
    %26 = arith.mulf %25, %15 : vector<2x8x8xf32>
    %27 = arith.addf %13, %26 : vector<2x8x8xf32>
    %c0_11 = arith.constant 0 : index
    %c0_12 = arith.constant 0 : index
    %c0_13 = arith.constant 0 : index
    %c0_14 = arith.constant 0 : index
    %c1_15 = arith.constant 1 : index
    %28 = vector.load %arg2[%c0_11, %c0_12, %c0_13, %c0_14, %c1_15] : memref<4x2x1x9x9xf32, #tpu.memory_space<vmem>>, vector<1x2x1x8x8xf32>
    %29 = vector.shape_cast %28 : vector<1x2x1x8x8xf32> to vector<2x8x8xf32>
    %c2 = arith.constant 2 : index
    %30 = memref.load %arg4[%c2] : memref<27xf32, #tpu.memory_space<smem>>
    %31 = vector.broadcast %30 : f32 to vector<2x8x8xf32>
    %32 = arith.mulf %31, %29 : vector<2x8x8xf32>
    %33 = arith.addf %19, %32 : vector<2x8x8xf32>
    %c11 = arith.constant 11 : index
    %34 = memref.load %arg4[%c11] : memref<27xf32, #tpu.memory_space<smem>>
    %35 = vector.broadcast %34 : f32 to vector<2x8x8xf32>
    %36 = arith.mulf %35, %29 : vector<2x8x8xf32>
    %37 = arith.addf %23, %36 : vector<2x8x8xf32>
    %c20 = arith.constant 20 : index
    %38 = memref.load %arg4[%c20] : memref<27xf32, #tpu.memory_space<smem>>
    %39 = vector.broadcast %38 : f32 to vector<2x8x8xf32>
    %40 = arith.mulf %39, %29 : vector<2x8x8xf32>
    %41 = arith.addf %27, %40 : vector<2x8x8xf32>
    %c2_16 = arith.constant 2 : index
    %c0_17 = arith.constant 0 : index
    %c0_18 = arith.constant 0 : index
    %c0_19 = arith.constant 0 : index
    %c0_20 = arith.constant 0 : index
    %42 = vector.load %arg2[%c2_16, %c0_17, %c0_18, %c0_19, %c0_20] : memref<4x2x1x9x9xf32, #tpu.memory_space<vmem>>, vector<1x2x1x8x8xf32>
    %43 = vector.shape_cast %42 : vector<1x2x1x8x8xf32> to vector<2x8x8xf32>
    %c3 = arith.constant 3 : index
    %44 = memref.load %arg4[%c3] : memref<27xf32, #tpu.memory_space<smem>>
    %45 = vector.broadcast %44 : f32 to vector<2x8x8xf32>
    %46 = arith.mulf %45, %43 : vector<2x8x8xf32>
    %47 = arith.addf %33, %46 : vector<2x8x8xf32>
    %c12 = arith.constant 12 : index
    %48 = memref.load %arg4[%c12] : memref<27xf32, #tpu.memory_space<smem>>
    %49 = vector.broadcast %48 : f32 to vector<2x8x8xf32>
    %50 = arith.mulf %49, %43 : vector<2x8x8xf32>
    %51 = arith.addf %37, %50 : vector<2x8x8xf32>
    %c21 = arith.constant 21 : index
    %52 = memref.load %arg4[%c21] : memref<27xf32, #tpu.memory_space<smem>>
    %53 = vector.broadcast %52 : f32 to vector<2x8x8xf32>
    %54 = arith.mulf %53, %43 : vector<2x8x8xf32>
    %55 = arith.addf %41, %54 : vector<2x8x8xf32>
    %c3_21 = arith.constant 3 : index
    %c0_22 = arith.constant 0 : index
    %c0_23 = arith.constant 0 : index
    %c0_24 = arith.constant 0 : index
    %c0_25 = arith.constant 0 : index
    %56 = vector.load %arg2[%c3_21, %c0_22, %c0_23, %c0_24, %c0_25] : memref<4x2x1x9x9xf32, #tpu.memory_space<vmem>>, vector<1x2x1x8x8xf32>
    %57 = vector.shape_cast %56 : vector<1x2x1x8x8xf32> to vector<2x8x8xf32>
    %c4 = arith.constant 4 : index
    %58 = memref.load %arg4[%c4] : memref<27xf32, #tpu.memory_space<smem>>
    %59 = vector.broadcast %58 : f32 to vector<2x8x8xf32>
    %60 = arith.mulf %59, %57 : vector<2x8x8xf32>
    %61 = arith.addf %47, %60 : vector<2x8x8xf32>
    %c13 = arith.constant 13 : index
    %62 = memref.load %arg4[%c13] : memref<27xf32, #tpu.memory_space<smem>>
    %63 = vector.broadcast %62 : f32 to vector<2x8x8xf32>
    %64 = arith.mulf %63, %57 : vector<2x8x8xf32>
    %65 = arith.addf %51, %64 : vector<2x8x8xf32>
    %c22 = arith.constant 22 : index
    %66 = memref.load %arg4[%c22] : memref<27xf32, #tpu.memory_space<smem>>
    %67 = vector.broadcast %66 : f32 to vector<2x8x8xf32>
    %68 = arith.mulf %67, %57 : vector<2x8x8xf32>
    %69 = arith.addf %55, %68 : vector<2x8x8xf32>
    %c2_26 = arith.constant 2 : index
    %c0_27 = arith.constant 0 : index
    %c0_28 = arith.constant 0 : index
    %c0_29 = arith.constant 0 : index
    %c1_30 = arith.constant 1 : index
    %70 = vector.load %arg2[%c2_26, %c0_27, %c0_28, %c0_29, %c1_30] : memref<4x2x1x9x9xf32, #tpu.memory_space<vmem>>, vector<1x2x1x8x8xf32>
    %71 = vector.shape_cast %70 : vector<1x2x1x8x8xf32> to vector<2x8x8xf32>
    %c5 = arith.constant 5 : index
    %72 = memref.load %arg4[%c5] : memref<27xf32, #tpu.memory_space<smem>>
    %73 = vector.broadcast %72 : f32 to vector<2x8x8xf32>
    %74 = arith.mulf %73, %71 : vector<2x8x8xf32>
    %75 = arith.addf %61, %74 : vector<2x8x8xf32>
    %c14 = arith.constant 14 : index
    %76 = memref.load %arg4[%c14] : memref<27xf32, #tpu.memory_space<smem>>
    %77 = vector.broadcast %76 : f32 to vector<2x8x8xf32>
    %78 = arith.mulf %77, %71 : vector<2x8x8xf32>
    %79 = arith.addf %65, %78 : vector<2x8x8xf32>
    %c23 = arith.constant 23 : index
    %80 = memref.load %arg4[%c23] : memref<27xf32, #tpu.memory_space<smem>>
    %81 = vector.broadcast %80 : f32 to vector<2x8x8xf32>
    %82 = arith.mulf %81, %71 : vector<2x8x8xf32>
    %83 = arith.addf %69, %82 : vector<2x8x8xf32>
    %c0_31 = arith.constant 0 : index
    %c0_32 = arith.constant 0 : index
    %c0_33 = arith.constant 0 : index
    %c1_34 = arith.constant 1 : index
    %c0_35 = arith.constant 0 : index
    %84 = vector.load %arg2[%c0_31, %c0_32, %c0_33, %c1_34, %c0_35] : memref<4x2x1x9x9xf32, #tpu.memory_space<vmem>>, vector<1x2x1x8x8xf32>
    %85 = vector.shape_cast %84 : vector<1x2x1x8x8xf32> to vector<2x8x8xf32>
    %c6 = arith.constant 6 : index
    %86 = memref.load %arg4[%c6] : memref<27xf32, #tpu.memory_space<smem>>
    %87 = vector.broadcast %86 : f32 to vector<2x8x8xf32>
    %88 = arith.mulf %87, %85 : vector<2x8x8xf32>
    %89 = arith.addf %75, %88 : vector<2x8x8xf32>
    %c15 = arith.constant 15 : index
    %90 = memref.load %arg4[%c15] : memref<27xf32, #tpu.memory_space<smem>>
    %91 = vector.broadcast %90 : f32 to vector<2x8x8xf32>
    %92 = arith.mulf %91, %85 : vector<2x8x8xf32>
    %93 = arith.addf %79, %92 : vector<2x8x8xf32>
    %c24 = arith.constant 24 : index
    %94 = memref.load %arg4[%c24] : memref<27xf32, #tpu.memory_space<smem>>
    %95 = vector.broadcast %94 : f32 to vector<2x8x8xf32>
    %96 = arith.mulf %95, %85 : vector<2x8x8xf32>
    %97 = arith.addf %83, %96 : vector<2x8x8xf32>
    %c1_36 = arith.constant 1 : index
    %c0_37 = arith.constant 0 : index
    %c0_38 = arith.constant 0 : index
    %c1_39 = arith.constant 1 : index
    %c0_40 = arith.constant 0 : index
    %98 = vector.load %arg2[%c1_36, %c0_37, %c0_38, %c1_39, %c0_40] : memref<4x2x1x9x9xf32, #tpu.memory_space<vmem>>, vector<1x2x1x8x8xf32>
    %99 = vector.shape_cast %98 : vector<1x2x1x8x8xf32> to vector<2x8x8xf32>
    %c7 = arith.constant 7 : index
    %100 = memref.load %arg4[%c7] : memref<27xf32, #tpu.memory_space<smem>>
    %101 = vector.broadcast %100 : f32 to vector<2x8x8xf32>
    %102 = arith.mulf %101, %99 : vector<2x8x8xf32>
    %103 = arith.addf %89, %102 : vector<2x8x8xf32>
    %c16 = arith.constant 16 : index
    %104 = memref.load %arg4[%c16] : memref<27xf32, #tpu.memory_space<smem>>
    %105 = vector.broadcast %104 : f32 to vector<2x8x8xf32>
    %106 = arith.mulf %105, %99 : vector<2x8x8xf32>
    %107 = arith.addf %93, %106 : vector<2x8x8xf32>
    %c25 = arith.constant 25 : index
    %108 = memref.load %arg4[%c25] : memref<27xf32, #tpu.memory_space<smem>>
    %109 = vector.broadcast %108 : f32 to vector<2x8x8xf32>
    %110 = arith.mulf %109, %99 : vector<2x8x8xf32>
    %111 = arith.addf %97, %110 : vector<2x8x8xf32>
    %c0_41 = arith.constant 0 : index
    %c0_42 = arith.constant 0 : index
    %c0_43 = arith.constant 0 : index
    %c1_44 = arith.constant 1 : index
    %c1_45 = arith.constant 1 : index
    %112 = vector.load %arg2[%c0_41, %c0_42, %c0_43, %c1_44, %c1_45] : memref<4x2x1x9x9xf32, #tpu.memory_space<vmem>>, vector<1x2x1x8x8xf32>
    %113 = vector.shape_cast %112 : vector<1x2x1x8x8xf32> to vector<2x8x8xf32>
    %c8 = arith.constant 8 : index
    %114 = memref.load %arg4[%c8] : memref<27xf32, #tpu.memory_space<smem>>
    %115 = vector.broadcast %114 : f32 to vector<2x8x8xf32>
    %116 = arith.mulf %115, %113 : vector<2x8x8xf32>
    %117 = arith.addf %103, %116 : vector<2x8x8xf32>
    %c17 = arith.constant 17 : index
    %118 = memref.load %arg4[%c17] : memref<27xf32, #tpu.memory_space<smem>>
    %119 = vector.broadcast %118 : f32 to vector<2x8x8xf32>
    %120 = arith.mulf %119, %113 : vector<2x8x8xf32>
    %121 = arith.addf %107, %120 : vector<2x8x8xf32>
    %c26 = arith.constant 26 : index
    %122 = memref.load %arg4[%c26] : memref<27xf32, #tpu.memory_space<smem>>
    %123 = vector.broadcast %122 : f32 to vector<2x8x8xf32>
    %124 = arith.mulf %123, %113 : vector<2x8x8xf32>
    %125 = arith.addf %111, %124 : vector<2x8x8xf32>
    %c0_46 = arith.constant 0 : index
    %126 = memref.load %arg5[%c0_46] : memref<3xf32, #tpu.memory_space<smem>>
    %127 = vector.broadcast %126 : f32 to vector<2x8x8xf32>
    %128 = arith.addf %117, %127 : vector<2x8x8xf32>
    %cst = arith.constant 0.000000e+00 : f32
    %129 = vector.broadcast %cst : f32 to vector<2x8x8xf32>
    %130 = arith.maximumf %128, %129 : vector<2x8x8xf32>
    %cst_47 = arith.constant dense<0.000000e+00> : vector<2x8xf32>
    %131 = vector.multi_reduction <add>, %130, %cst_47 [2] : vector<2x8x8xf32> to vector<2x8xf32>
    %c0_48 = arith.constant 0 : index
    %c0_49 = arith.constant 0 : index
    %c0_50 = arith.constant 0 : index
    %132 = vector.load %arg16[%c0_48, %c0_49, %c0_50] : memref<3x2x1xf32, #tpu.memory_space<vmem>>, vector<1x2x1xf32>
    %133 = vector.shape_cast %132 : vector<1x2x1xf32> to vector<2x1xf32>
    %cst_51 = arith.constant dense<0.000000e+00> : vector<2xf32>
    %134 = vector.multi_reduction <add>, %131, %cst_51 [1] : vector<2x8xf32> to vector<2xf32>
    %135 = vector.shape_cast %134 : vector<2xf32> to vector<2x1xf32>
    %136 = arith.addf %133, %135 : vector<2x1xf32>
    %c0_52 = arith.constant 0 : index
    %c0_53 = arith.constant 0 : index
    %c0_54 = arith.constant 0 : index
    %137 = vector.load %arg16[%c0_52, %c0_53, %c0_54] : memref<3x2x1xf32, #tpu.memory_space<vmem>>, vector<1x2x1xf32>
    %138 = vector.shape_cast %137 : vector<1x2x1xf32> to vector<2x1xf32>
    %139 = vector.shape_cast %136 : vector<2x1xf32> to vector<1x2x1xf32>
    tpu.vector_store %arg16[%c0_52, %c0_53, %c0_54], %139 {strides = array<i32>} : memref<3x2x1xf32, #tpu.memory_space<vmem>>, vector<1x2x1xf32>,
    %c1_55 = arith.constant 1 : index
    %140 = memref.load %arg5[%c1_55] : memref<3xf32, #tpu.memory_space<smem>>
    %141 = vector.broadcast %140 : f32 to vector<2x8x8xf32>
    %142 = arith.addf %121, %141 : vector<2x8x8xf32>
    %cst_56 = arith.constant 0.000000e+00 : f32
    %143 = vector.broadcast %cst_56 : f32 to vector<2x8x8xf32>
    %144 = arith.maximumf %142, %143 : vector<2x8x8xf32>
    %cst_57 = arith.constant dense<0.000000e+00> : vector<2x8xf32>
    %145 = vector.multi_reduction <add>, %144, %cst_57 [2] : vector<2x8x8xf32> to vector<2x8xf32>
    %c1_58 = arith.constant 1 : index
    %c0_59 = arith.constant 0 : index
    %c0_60 = arith.constant 0 : index
    %146 = vector.load %arg16[%c1_58, %c0_59, %c0_60] : memref<3x2x1xf32, #tpu.memory_space<vmem>>, vector<1x2x1xf32>
    %147 = vector.shape_cast %146 : vector<1x2x1xf32> to vector<2x1xf32>
    %cst_61 = arith.constant dense<0.000000e+00> : vector<2xf32>
    %148 = vector.multi_reduction <add>, %145, %cst_61 [1] : vector<2x8xf32> to vector<2xf32>
    %149 = vector.shape_cast %148 : vector<2xf32> to vector<2x1xf32>
    %150 = arith.addf %147, %149 : vector<2x1xf32>
    %c1_62 = arith.constant 1 : index
    %c0_63 = arith.constant 0 : index
    %c0_64 = arith.constant 0 : index
    %151 = vector.load %arg16[%c1_62, %c0_63, %c0_64] : memref<3x2x1xf32, #tpu.memory_space<vmem>>, vector<1x2x1xf32>
    %152 = vector.shape_cast %151 : vector<1x2x1xf32> to vector<2x1xf32>
    %153 = vector.shape_cast %150 : vector<2x1xf32> to vector<1x2x1xf32>
    tpu.vector_store %arg16[%c1_62, %c0_63, %c0_64], %153 {strides = array<i32>} : memref<3x2x1xf32, #tpu.memory_space<vmem>>, vector<1x2x1xf32>,
    %c2_65 = arith.constant 2 : index
    %154 = memref.load %arg5[%c2_65] : memref<3xf32, #tpu.memory_space<smem>>
    %155 = vector.broadcast %154 : f32 to vector<2x8x8xf32>
    %156 = arith.addf %125, %155 : vector<2x8x8xf32>
    %cst_66 = arith.constant 0.000000e+00 : f32
    %157 = vector.broadcast %cst_66 : f32 to vector<2x8x8xf32>
    %158 = arith.maximumf %156, %157 : vector<2x8x8xf32>
    %cst_67 = arith.constant dense<0.000000e+00> : vector<2x8xf32>
    %159 = vector.multi_reduction <add>, %158, %cst_67 [2] : vector<2x8x8xf32> to vector<2x8xf32>
    %c2_68 = arith.constant 2 : index
    %c0_69 = arith.constant 0 : index
    %c0_70 = arith.constant 0 : index
    %160 = vector.load %arg16[%c2_68, %c0_69, %c0_70] : memref<3x2x1xf32, #tpu.memory_space<vmem>>, vector<1x2x1xf32>
    %161 = vector.shape_cast %160 : vector<1x2x1xf32> to vector<2x1xf32>
    %cst_71 = arith.constant dense<0.000000e+00> : vector<2xf32>
    %162 = vector.multi_reduction <add>, %159, %cst_71 [1] : vector<2x8xf32> to vector<2xf32>
    %163 = vector.shape_cast %162 : vector<2xf32> to vector<2x1xf32>
    %164 = arith.addf %161, %163 : vector<2x1xf32>
    %c2_72 = arith.constant 2 : index
    %c0_73 = arith.constant 0 : index
    %c0_74 = arith.constant 0 : index
    %165 = vector.load %arg16[%c2_72, %c0_73, %c0_74] : memref<3x2x1xf32, #tpu.memory_space<vmem>>, vector<1x2x1xf32>
    %166 = vector.shape_cast %165 : vector<1x2x1xf32> to vector<2x1xf32>
    %167 = vector.shape_cast %164 : vector<2x1xf32> to vector<1x2x1xf32>
    tpu.vector_store %arg16[%c2_72, %c0_73, %c0_74], %167 {strides = array<i32>} : memref<3x2x1xf32, #tpu.memory_space<vmem>>, vector<1x2x1xf32>,
    %c0_i32_75 = arith.constant 0 : i32
    %168 = arith.cmpi eq, %arg1, %c0_i32_75 : i32
    %169 = arith.extui %168 : i1 to i32
    %c0_i32_76 = arith.constant 0 : i32
    %170 = arith.cmpi ne, %169, %c0_i32_76 : i32
    scf.if %170 {
      %c0_77 = arith.constant 0 : index
      %c0_78 = arith.constant 0 : index
      %c0_79 = arith.constant 0 : index
      %171 = vector.load %arg16[%c0_77, %c0_78, %c0_79] : memref<3x2x1xf32, #tpu.memory_space<vmem>>, vector<1x2x1xf32>
      %172 = vector.shape_cast %171 : vector<1x2x1xf32> to vector<2x1xf32>
      %cst_80 = arith.constant 1.562500e-02 : f32
      %173 = vector.broadcast %cst_80 : f32 to vector<2x1xf32>
      %174 = arith.mulf %172, %173 : vector<2x1xf32>
      %c1_81 = arith.constant 1 : index
      %c0_82 = arith.constant 0 : index
      %c0_83 = arith.constant 0 : index
      %175 = vector.load %arg16[%c1_81, %c0_82, %c0_83] : memref<3x2x1xf32, #tpu.memory_space<vmem>>, vector<1x2x1xf32>
      %176 = vector.shape_cast %175 : vector<1x2x1xf32> to vector<2x1xf32>
      %cst_84 = arith.constant 1.562500e-02 : f32
      %177 = vector.broadcast %cst_84 : f32 to vector<2x1xf32>
      %178 = arith.mulf %176, %177 : vector<2x1xf32>
      %c2_85 = arith.constant 2 : index
      %c0_86 = arith.constant 0 : index
      %c0_87 = arith.constant 0 : index
      %179 = vector.load %arg16[%c2_85, %c0_86, %c0_87] : memref<3x2x1xf32, #tpu.memory_space<vmem>>, vector<1x2x1xf32>
      %180 = vector.shape_cast %179 : vector<1x2x1xf32> to vector<2x1xf32>
      %cst_88 = arith.constant 1.562500e-02 : f32
      %181 = vector.broadcast %cst_88 : f32 to vector<2x1xf32>
      %182 = arith.mulf %180, %181 : vector<2x1xf32>
      %c0_89 = arith.constant 0 : index
      %c0_90 = arith.constant 0 : index
      %183 = vector.load %arg8[%c0_89, %c0_90] : memref<1x512xf32, #tpu.memory_space<vmem>>, vector<1x512xf32>
      %c0_91 = arith.constant 0 : index
      %c0_92 = arith.constant 0 : index
      %184 = vector.load %arg7[%c0_91, %c0_92] : memref<3x512xf32, #tpu.memory_space<vmem>>, vector<1x512xf32>
      %185 = vector.broadcast %174 : vector<2x1xf32> to vector<2x512xf32>
      %186 = vector.broadcast %184 : vector<1x512xf32> to vector<2x512xf32>
      %187 = arith.mulf %185, %186 : vector<2x512xf32>
      %188 = vector.broadcast %183 : vector<1x512xf32> to vector<2x512xf32>
      %189 = arith.addf %188, %187 : vector<2x512xf32>
      %c1_93 = arith.constant 1 : index
      %c0_94 = arith.constant 0 : index
      %190 = vector.load %arg7[%c1_93, %c0_94] : memref<3x512xf32, #tpu.memory_space<vmem>>, vector<1x512xf32>
      %191 = vector.broadcast %178 : vector<2x1xf32> to vector<2x512xf32>
      %192 = vector.broadcast %190 : vector<1x512xf32> to vector<2x512xf32>
      %193 = arith.mulf %191, %192 : vector<2x512xf32>
      %194 = arith.addf %189, %193 : vector<2x512xf32>
      %c2_95 = arith.constant 2 : index
      %c0_96 = arith.constant 0 : index
      %195 = vector.load %arg7[%c2_95, %c0_96] : memref<3x512xf32, #tpu.memory_space<vmem>>, vector<1x512xf32>
      %196 = vector.broadcast %182 : vector<2x1xf32> to vector<2x512xf32>
      %197 = vector.broadcast %195 : vector<1x512xf32> to vector<2x512xf32>
      %198 = arith.mulf %196, %197 : vector<2x512xf32>
      %199 = arith.addf %194, %198 : vector<2x512xf32>
      %c0_97 = arith.constant 0 : index
      %c0_98 = arith.constant 0 : index
      %200 = vector.load %arg10[%c0_97, %c0_98] : memref<1x512xf32, #tpu.memory_space<vmem>>, vector<1x512xf32>
      %c0_99 = arith.constant 0 : index
      %c0_100 = arith.constant 0 : index
      %201 = vector.load %arg3[%c0_99, %c0_100] : memref<2x4xf32, #tpu.memory_space<vmem>>, vector<2x1xf32>
      %c0_101 = arith.constant 0 : index
      %c0_102 = arith.constant 0 : index
      %202 = vector.load %arg9[%c0_101, %c0_102] : memref<4x512xf32, #tpu.memory_space<vmem>>, vector<1x512xf32>
      %203 = vector.broadcast %201 : vector<2x1xf32> to vector<2x512xf32>
      %204 = vector.broadcast %202 : vector<1x512xf32> to vector<2x512xf32>
      %205 = arith.mulf %203, %204 : vector<2x512xf32>
      %206 = vector.broadcast %200 : vector<1x512xf32> to vector<2x512xf32>
      %207 = arith.addf %206, %205 : vector<2x512xf32>
      %c0_103 = arith.constant 0 : index
      %c1_104 = arith.constant 1 : index
      %208 = vector.load %arg3[%c0_103, %c1_104] : memref<2x4xf32, #tpu.memory_space<vmem>>, vector<2x1xf32>
      %c1_105 = arith.constant 1 : index
      %c0_106 = arith.constant 0 : index
      %209 = vector.load %arg9[%c1_105, %c0_106] : memref<4x512xf32, #tpu.memory_space<vmem>>, vector<1x512xf32>
      %210 = vector.broadcast %208 : vector<2x1xf32> to vector<2x512xf32>
      %211 = vector.broadcast %209 : vector<1x512xf32> to vector<2x512xf32>
      %212 = arith.mulf %210, %211 : vector<2x512xf32>
      %213 = arith.addf %207, %212 : vector<2x512xf32>
      %c0_107 = arith.constant 0 : index
      %c2_108 = arith.constant 2 : index
      %214 = vector.load %arg3[%c0_107, %c2_108] : memref<2x4xf32, #tpu.memory_space<vmem>>, vector<2x1xf32>
      %c2_109 = arith.constant 2 : index
      %c0_110 = arith.constant 0 : index
      %215 = vector.load %arg9[%c2_109, %c0_110] : memref<4x512xf32, #tpu.memory_space<vmem>>, vector<1x512xf32>
      %216 = vector.broadcast %214 : vector<2x1xf32> to vector<2x512xf32>
      %217 = vector.broadcast %215 : vector<1x512xf32> to vector<2x512xf32>
      %218 = arith.mulf %216, %217 : vector<2x512xf32>
      %219 = arith.addf %213, %218 : vector<2x512xf32>
      %c0_111 = arith.constant 0 : index
      %c3_112 = arith.constant 3 : index
      %220 = vector.load %arg3[%c0_111, %c3_112] : memref<2x4xf32, #tpu.memory_space<vmem>>, vector<2x1xf32>
      %c3_113 = arith.constant 3 : index
      %c0_114 = arith.constant 0 : index
      %221 = vector.load %arg9[%c3_113, %c0_114] : memref<4x512xf32, #tpu.memory_space<vmem>>, vector<1x512xf32>
      %222 = vector.broadcast %220 : vector<2x1xf32> to vector<2x512xf32>
      %223 = vector.broadcast %221 : vector<1x512xf32> to vector<2x512xf32>
      %224 = arith.mulf %222, %223 : vector<2x512xf32>
      %225 = arith.addf %219, %224 : vector<2x512xf32>
      %cst_115 = arith.constant 0.000000e+00 : f32
      %226 = vector.broadcast %cst_115 : f32 to vector<2x512xf32>
      %227 = arith.maximumf %225, %226 : vector<2x512xf32>
      %c0_116 = arith.constant 0 : index
      %c0_117 = arith.constant 0 : index
      %228 = vector.load %arg11[%c0_116, %c0_117] : memref<512x256xf32, #tpu.memory_space<vmem>>, vector<512x256xf32>
      %cst_118 = arith.constant dense<0.000000e+00> : vector<2x256xf32>
      %229 = tpu.matmul %227, %228, %cst_118 {dimension_numbers = #tpu.dot_dimension_numbers<[1], [0], [0], [1], [0, 0, 1, 1], [], []>} : vector<2x512xf32>, vector<512x256xf32>, vector<2x256xf32> -> vector<2x256xf32>
      %c0_119 = arith.constant 0 : index
      %c0_120 = arith.constant 0 : index
      %230 = vector.load %arg12[%c0_119, %c0_120] : memref<1x256xf32, #tpu.memory_space<vmem>>, vector<1x256xf32>
      %231 = vector.broadcast %230 : vector<1x256xf32> to vector<2x256xf32>
      %232 = arith.addf %229, %231 : vector<2x256xf32>
      %cst_121 = arith.constant 0.000000e+00 : f32
      %233 = vector.broadcast %cst_121 : f32 to vector<2x256xf32>
      %234 = arith.maximumf %232, %233 : vector<2x256xf32>
      %c0_122 = arith.constant 0 : index
      %c0_123 = arith.constant 0 : index
      %235 = vector.load %arg13[%c0_122, %c0_123] : memref<1x512xf32, #tpu.memory_space<vmem>>, vector<1x512xf32>
      %236 = vector.broadcast %235 : vector<1x512xf32> to vector<2x512xf32>
      %237 = arith.mulf %199, %236 : vector<2x512xf32>
      %cst_124 = arith.constant dense<0.000000e+00> : vector<2xf32>
      %238 = vector.multi_reduction <add>, %237, %cst_124 [1] : vector<2x512xf32> to vector<2xf32>
      %239 = vector.shape_cast %238 : vector<2xf32> to vector<2x1xf32>
      %c0_125 = arith.constant 0 : index
      %c0_126 = arith.constant 0 : index
      %240 = vector.load %arg14[%c0_125, %c0_126] : memref<1x256xf32, #tpu.memory_space<vmem>>, vector<1x256xf32>
      %241 = vector.broadcast %240 : vector<1x256xf32> to vector<2x256xf32>
      %242 = arith.mulf %234, %241 : vector<2x256xf32>
      %cst_127 = arith.constant dense<0.000000e+00> : vector<2xf32>
      %243 = vector.multi_reduction <add>, %242, %cst_127 [1] : vector<2x256xf32> to vector<2xf32>
      %244 = vector.shape_cast %243 : vector<2xf32> to vector<2x1xf32>
      %245 = arith.addf %239, %244 : vector<2x1xf32>
      %c0_128 = arith.constant 0 : index
      %246 = memref.load %arg6[%c0_128] : memref<1xf32, #tpu.memory_space<smem>>
      %247 = vector.broadcast %246 : f32 to vector<2x1xf32>
      %248 = arith.addf %245, %247 : vector<2x1xf32>
      %c0_129 = arith.constant 0 : index
      %c0_130 = arith.constant 0 : index
      %249 = vector.load %arg15[%c0_129, %c0_130] : memref<2x1xf32, #tpu.memory_space<vmem>>, vector<2x1xf32>
      tpu.vector_store %arg15[%c0_129, %c0_130], %248 {strides = array<i32>} : memref<2x1xf32, #tpu.memory_space<vmem>>, vector<2x1xf32>,
    } else {
    }
    return
  }
  func.func @transform_0(%arg0: i32, %arg1: i32) -> (i32, i32, i32, i32, i32) {
    %c0_i32 = arith.constant 0 : i32
    %c0_i32_0 = arith.constant 0 : i32
    %c0_i32_1 = arith.constant 0 : i32
    %c0_i32_2 = arith.constant 0 : i32
    return %c0_i32, %arg0, %arg1, %c0_i32_0, %c0_i32_1 : i32, i32, i32, i32, i32
  }
  func.func @transform_1(%arg0: i32, %arg1: i32) -> (i32, i32) {
    %c0_i32 = arith.constant 0 : i32
    %c0_i32_0 = arith.constant 0 : i32
    return %arg0, %c0_i32 : i32, i32
  }
  func.func @transform_2(%arg0: i32, %arg1: i32) -> i32 {
    %c0_i32 = arith.constant 0 : i32
    %c0_i32_0 = arith.constant 0 : i32
    return %c0_i32 : i32
  }
  func.func @transform_3(%arg0: i32, %arg1: i32) -> i32 {
    %c0_i32 = arith.constant 0 : i32
    %c0_i32_0 = arith.constant 0 : i32
    return %c0_i32 : i32
  }
  func.func @transform_4(%arg0: i32, %arg1: i32) -> i32 {
    %c0_i32 = arith.constant 0 : i32
    %c0_i32_0 = arith.constant 0 : i32
    return %c0_i32 : i32
  }
  func.func @transform_5(%arg0: i32, %arg1: i32) -> (i32, i32) {
    %c0_i32 = arith.constant 0 : i32
    %c0_i32_0 = arith.constant 0 : i32
    %c0_i32_1 = arith.constant 0 : i32
    return %c0_i32, %c0_i32_0 : i32, i32
  }
  func.func @transform_6(%arg0: i32, %arg1: i32) -> (i32, i32) {
    %c0_i32 = arith.constant 0 : i32
    %c0_i32_0 = arith.constant 0 : i32
    %c0_i32_1 = arith.constant 0 : i32
    return %c0_i32, %c0_i32_0 : i32, i32
  }
  func.func @transform_7(%arg0: i32, %arg1: i32) -> (i32, i32) {
    %c0_i32 = arith.constant 0 : i32
    %c0_i32_0 = arith.constant 0 : i32
    %c0_i32_1 = arith.constant 0 : i32
    return %c0_i32, %c0_i32_0 : i32, i32
  }
  func.func @transform_8(%arg0: i32, %arg1: i32) -> (i32, i32) {
    %c0_i32 = arith.constant 0 : i32
    %c0_i32_0 = arith.constant 0 : i32
    %c0_i32_1 = arith.constant 0 : i32
    return %c0_i32, %c0_i32_0 : i32, i32
  }
  func.func @transform_9(%arg0: i32, %arg1: i32) -> (i32, i32) {
    %c0_i32 = arith.constant 0 : i32
    %c0_i32_0 = arith.constant 0 : i32
    %c0_i32_1 = arith.constant 0 : i32
    return %c0_i32, %c0_i32_0 : i32, i32
  }
  func.func @transform_10(%arg0: i32, %arg1: i32) -> (i32, i32) {
    %c0_i32 = arith.constant 0 : i32
    %c0_i32_0 = arith.constant 0 : i32
    %c0_i32_1 = arith.constant 0 : i32
    return %c0_i32, %c0_i32_0 : i32, i32
  }
  func.func @transform_11(%arg0: i32, %arg1: i32) -> (i32, i32) {
    %c0_i32 = arith.constant 0 : i32
    %c0_i32_0 = arith.constant 0 : i32
    %c0_i32_1 = arith.constant 0 : i32
    return %c0_i32, %c0_i32_0 : i32, i32
  }
  func.func @transform_12(%arg0: i32, %arg1: i32) -> (i32, i32) {
    %c0_i32 = arith.constant 0 : i32
    %c0_i32_0 = arith.constant 0 : i32
    %c0_i32_1 = arith.constant 0 : i32
    return %c0_i32, %c0_i32_0 : i32, i32
  }
  func.func @transform_13(%arg0: i32, %arg1: i32) -> (i32, i32) {
    %c0_i32 = arith.constant 0 : i32
    %c0_i32_0 = arith.constant 0 : i32
    return %arg0, %c0_i32 : i32, i32
  }
}

</mosaic_0001>

<llo_original>
// kernel: model_forward.1
$region0: #{model_forward.1}
  #allocation0 [shape = 'u32[]', space=smem, size = 0x4, offset = 0x4, fixed_abs, tag = 'smem constant byte address 0x4 - core index']
  #allocation1 [shape = 'u32[72,128]{1,0:T(1,128)}', space=vmem, size = 0x9000, scoped, tag = 'internal scratch']
  #allocation2 [shape = 'f32[3,2,1]{2,1,0:T(2,128)}', space=vmem, size = 0xc00, scoped, tag = 'scratch operand']
  #allocation3 [shape = 'f32[1]{0:T(128)S(6)}', space=smem, size = 0x200, scoped, tag = 'scoped memory for model_forward.1']
  %s0 = inlined_call_operand.vmem [shape: f32[4,2,1,9,9], index: 0, kind: input, shape index: {}]
  %s1 = inlined_call_operand.vmem [shape: f32[2,4], index: 1, kind: input, shape index: {}]
  %s2 = inlined_call_operand.vmem [shape: f32[27], index: 2, kind: input, shape index: {}]
  %s3 = inlined_call_operand.vmem [shape: f32[3], index: 3, kind: input, shape index: {}]
  %s4 = inlined_call_operand.<no memory space> [shape: f32[1], index: 4, kind: input, shape index: {}]
  %s5 = inlined_call_operand.vmem [shape: f32[3,512], index: 5, kind: input, shape index: {}]
  %s6 = inlined_call_operand.vmem [shape: f32[1,512], index: 6, kind: input, shape index: {}]
  %s7 = inlined_call_operand.vmem [shape: f32[4,512], index: 7, kind: input, shape index: {}]
  %s8 = inlined_call_operand.vmem [shape: f32[1,512], index: 8, kind: input, shape index: {}]
  %s9 = inlined_call_operand.vmem [shape: f32[512,256], index: 9, kind: input, shape index: {}]
  %s10 = inlined_call_operand.vmem [shape: f32[1,256], index: 10, kind: input, shape index: {}]
  %s11 = inlined_call_operand.vmem [shape: f32[1,512], index: 11, kind: input, shape index: {}]
  %s12 = inlined_call_operand.vmem [shape: f32[1,256], index: 12, kind: input, shape index: {}]
  %s13 = inlined_call_operand.vmem [shape: f32[2,1], index: 13, kind: output, shape index: {}]
  %s14 = sld [smem:[#allocation0]]
  $region78: #{model_forward.1} parent=0
    _
  %s16 = ssub.s32 1, %s14
  %s17 = scalar_select 0, %s16, %s14
  %18 = sst [smem:[#allocation3]] %s4
  $region1: #{model_forward.1} parent=0
    #allocation4 [shape = 'u8[512]{0}', space=smem, size = 0x200, scoped, tag = 'input window, operand 2, single buffered']
    #allocation5 [shape = 's32[1]{0}', space=sflag, size = 0x4, scoped, tag = 'scoped memory for model_forward.1']
    #allocation6 [shape = 'u8[512]{0}', space=smem, size = 0x200, scoped, tag = 'input window, operand 3, single buffered']
    #allocation7 [shape = 's32[1]{0}', space=sflag, size = 0x4, scoped, tag = 'scoped memory for model_forward.1']
    %19 = vsyncpa [#allocation5], 0
    %20 = vsyncpa [#allocation7], 0
    // Predicated region
    $region2: #{model_forward.1} parent=1 // pred_check
      _
    $region3: #{model_forward.1} parent=1 // pred_check_branch
      %22 = sbr.rel (0) target = $region5
    $region4: #{model_forward.1} parent=1 // pred_region
      _
    $region5: #{model_forward.1} parent=1 // pred_fallthru
      _
    // Predicated region
    $region6: #{model_forward.1} parent=1 // pred_check
      _
    $region7: #{model_forward.1} parent=1 // pred_check_branch
      %24 = sbr.rel (0) target = $region9
    $region8: #{model_forward.1} parent=1 // pred_region
      _
    $region9: #{model_forward.1} parent=1 // pred_fallthru
      _
    // Predicated region
    $region10: #{model_forward.1} parent=1 // pred_check
      _
    $region11: #{model_forward.1} parent=1 // pred_check_branch
      %26 = sbr.rel (0) target = $region13
    $region12: #{model_forward.1} parent=1 // pred_region
      %28 = vsyncadd [#allocation5], 0
      %s30 = sshll.u32 %s2, 4
      %s31 = int_to_ptr.vmem [resolvable:$true] %s30
      %33 = dma.vmem_to_smem %s31, 16, [#allocation4], [#allocation5]
    $region13: #{model_forward.1} parent=1 // pred_fallthru
      _
    // Predicated region
    $region14: #{model_forward.1} parent=1 // pred_check
      _
    $region15: #{model_forward.1} parent=1 // pred_check_branch
      %35 = sbr.rel (0) target = $region17
    $region16: #{model_forward.1} parent=1 // pred_region
      %37 = vsyncadd [#allocation7], 0
      %s39 = sshll.u32 %s3, 4
      %s40 = int_to_ptr.vmem [resolvable:$true] %s39
      %42 = dma.vmem_to_smem %s40, 16, [#allocation6], [#allocation7]
    $region17: #{model_forward.1} parent=1 // pred_fallthru
      _
    // Predicated region
    $region18: #{model_forward.1} parent=1 // pred_check
      _
    $region19: #{model_forward.1} parent=1 // pred_check_branch
      %44 = sbr.rel (0) target = $region21
    $region20: #{model_forward.1} parent=1 // pred_region
      _
    $region21: #{model_forward.1} parent=1 // pred_fallthru
      _
    // Predicated region
    $region22: #{model_forward.1} parent=1 // pred_check
      _
    $region23: #{model_forward.1} parent=1 // pred_check_branch
      %46 = sbr.rel (0) target = $region25
    $region24: #{model_forward.1} parent=1 // pred_region
      _
    $region25: #{model_forward.1} parent=1 // pred_fallthru
      _
    // Predicated region
    $region26: #{model_forward.1} parent=1 // pred_check
      _
    $region27: #{model_forward.1} parent=1 // pred_check_branch
      %48 = sbr.rel (0) target = $region29
    $region28: #{model_forward.1} parent=1 // pred_region
      _
    $region29: #{model_forward.1} parent=1 // pred_fallthru
      _
    // Predicated region
    $region30: #{model_forward.1} parent=1 // pred_check
      _
    $region31: #{model_forward.1} parent=1 // pred_check_branch
      %50 = sbr.rel (0) target = $region33
    $region32: #{model_forward.1} parent=1 // pred_region
      _
    $region33: #{model_forward.1} parent=1 // pred_fallthru
      _
    // Predicated region
    $region34: #{model_forward.1} parent=1 // pred_check
      _
    $region35: #{model_forward.1} parent=1 // pred_check_branch
      %52 = sbr.rel (0) target = $region37
    $region36: #{model_forward.1} parent=1 // pred_region
      _
    $region37: #{model_forward.1} parent=1 // pred_fallthru
      _
    // Predicated region
    $region38: #{model_forward.1} parent=1 // pred_check
      _
    $region39: #{model_forward.1} parent=1 // pred_check_branch
      %54 = sbr.rel (0) target = $region41
    $region40: #{model_forward.1} parent=1 // pred_region
      _
    $region41: #{model_forward.1} parent=1 // pred_fallthru
      _
    // Predicated region
    $region42: #{model_forward.1} parent=1 // pred_check
      _
    $region43: #{model_forward.1} parent=1 // pred_check_branch
      %56 = sbr.rel (0) target = $region45
    $region44: #{model_forward.1} parent=1 // pred_region
      _
    $region45: #{model_forward.1} parent=1 // pred_fallthru
      _
    // Predicated region
    $region46: #{model_forward.1} parent=1 // pred_check
      _
    $region47: #{model_forward.1} parent=1 // pred_check_branch
      %58 = sbr.rel (0) target = $region49
    $region48: #{model_forward.1} parent=1 // pred_region
      _
    $region49: #{model_forward.1} parent=1 // pred_fallthru
      _
    // Predicated region
    $region50: #{model_forward.1} parent=1 // pred_check
      _
    $region51: #{model_forward.1} parent=1 // pred_check_branch
      %60 = sbr.rel (0) target = $region53
    $region52: #{model_forward.1} parent=1 // pred_region
      _
    $region53: #{model_forward.1} parent=1 // pred_fallthru
      _
    // Predicated region
    $region54: #{model_forward.1} parent=1 // pred_check
      _
    $region55: #{model_forward.1} parent=1 // pred_check_branch
      %62 = sbr.rel (0) target = $region57
    $region56: #{model_forward.1} parent=1 // pred_region
      %64 = dma.done [#allocation5], 16
    $region57: #{model_forward.1} parent=1 // pred_fallthru
      _
    // Predicated region
    $region58: #{model_forward.1} parent=1 // pred_check
      _
    $region59: #{model_forward.1} parent=1 // pred_check_branch
      %66 = sbr.rel (0) target = $region61
    $region60: #{model_forward.1} parent=1 // pred_region
      %68 = dma.done [#allocation7], 16
    $region61: #{model_forward.1} parent=1 // pred_fallthru
      _
    %69 = sfence
    %p70 = scmp.eq.s32.totalorder 0, 0
    // Predicated region
    $region62: #{model_forward.1} parent=1 // pred_check
      %p71 = pneg %p70
    $region63: #{model_forward.1} parent=1 // pred_check_branch
      %73 = sbr.rel (%p71) target = $region65
    $region64: #{model_forward.1} parent=1 // pred_region
      %vm74 = vcmask 1024
      %75 = vst.msk [vmem:[#allocation2] sm:$0x3] %vm74, 0.0
      %76 = vst.msk [vmem:[#allocation2 + $0x2] sm:$0x3] %vm74, 0.0
      %77 = vst.msk [vmem:[#allocation2 + $0x4] sm:$0x3] %vm74, 0.0
    $region65: #{model_forward.1} parent=1 // pred_fallthru
      _
    %v78 = vld [vmem:[%s0] sm:$0xff]
    %v79 = vld [vmem:[%s0 + $0x10] sm:$0xff]
    %s80 = sld [smem:[#allocation4]]
    %v81 = vstv %s80
    %v82 = vmul.f32 %v81, %v78
    %v83 = vmul.f32 %v81, %v79
    %s84 = sld [smem:[#allocation4 + $0x9]]
    %v85 = vstv %s84
    %v86 = vmul.f32 %v85, %v78
    %v87 = vmul.f32 %v85, %v79
    %s88 = sld [smem:[#allocation4 + $0x12]]
    %v89 = vstv %s88
    %v90 = vmul.f32 %v89, %v78
    %v91 = vmul.f32 %v89, %v79
    %s92 = scalar_lea.vmem %s0, 32
    %v93 = vld [vmem:[%s92] sm:$0xff]
    %v94 = vld [vmem:[%s92 + $0x10] sm:$0xff]
    %s95 = sld [smem:[#allocation4 + $0x1]]
    %v96 = vstv %s95
    %v97 = vmul.f32 %v96, %v93
    %v98 = vmul.f32 %v96, %v94
    %v99 = vadd.f32 %v82, %v97
    %v100 = vadd.f32 %v83, %v98
    %s101 = sld [smem:[#allocation4 + $0xa]]
    %v102 = vstv %s101
    %v103 = vmul.f32 %v102, %v93
    %v104 = vmul.f32 %v102, %v94
    %v105 = vadd.f32 %v86, %v103
    %v106 = vadd.f32 %v87, %v104
    %s107 = sld [smem:[#allocation4 + $0x13]]
    %v108 = vstv %s107
    %v109 = vmul.f32 %v108, %v93
    %v110 = vmul.f32 %v108, %v94
    %v111 = vadd.f32 %v90, %v109
    %v112 = vadd.f32 %v91, %v110
    %s113 = sld [smem:[#allocation4 + $0x2]]
    %v114 = vstv %s113
    %v115 = vmul.f32 %v114, %v78
    %v116 = vmul.f32 %v114, %v79
    %119 = vrot.lane.b32.xlu0 %v115, 127
    %v120 = vpop.permute.xlu0 %119
    %121 = vrot.lane.b32.xlu0 %v116, 127
    %v122 = vpop.permute.xlu0 %121
    %v125 = vadd.f32 %v99, %v120
    %v126 = vadd.f32 %v100, %v122
    %s127 = sld [smem:[#allocation4 + $0xb]]
    %v128 = vstv %s127
    %v129 = vmul.f32 %v128, %v78
    %v130 = vmul.f32 %v128, %v79
    %133 = vrot.lane.b32.xlu0 %v129, 127
    %v134 = vpop.permute.xlu0 %133
    %135 = vrot.lane.b32.xlu0 %v130, 127
    %v136 = vpop.permute.xlu0 %135
    %v139 = vadd.f32 %v105, %v134
    %v140 = vadd.f32 %v106, %v136
    %s141 = sld [smem:[#allocation4 + $0x14]]
    %v142 = vstv %s141
    %v143 = vmul.f32 %v142, %v78
    %v144 = vmul.f32 %v142, %v79
    %147 = vrot.lane.b32.xlu0 %v143, 127
    %v148 = vpop.permute.xlu0 %147
    %149 = vrot.lane.b32.xlu0 %v144, 127
    %v150 = vpop.permute.xlu0 %149
    %v153 = vadd.f32 %v111, %v148
    %v154 = vadd.f32 %v112, %v150
    %s155 = scalar_lea.vmem %s0, 64
    %v156 = vld [vmem:[%s155] sm:$0xff]
    %v157 = vld [vmem:[%s155 + $0x10] sm:$0xff]
    %s158 = sld [smem:[#allocation4 + $0x3]]
    %v159 = vstv %s158
    %v160 = vmul.f32 %v159, %v156
    %v161 = vmul.f32 %v159, %v157
    %v162 = vadd.f32 %v125, %v160
    %v163 = vadd.f32 %v126, %v161
    %s164 = sld [smem:[#allocation4 + $0xc]]
    %v165 = vstv %s164
    %v166 = vmul.f32 %v165, %v156
    %v167 = vmul.f32 %v165, %v157
    %v168 = vadd.f32 %v139, %v166
    %v169 = vadd.f32 %v140, %v167
    %s170 = sld [smem:[#allocation4 + $0x15]]
    %v171 = vstv %s170
    %v172 = vmul.f32 %v171, %v156
    %v173 = vmul.f32 %v171, %v157
    %v174 = vadd.f32 %v153, %v172
    %v175 = vadd.f32 %v154, %v173
    %s176 = scalar_lea.vmem %s0, 96
    %v177 = vld [vmem:[%s176] sm:$0xff]
    %v178 = vld [vmem:[%s176 + $0x10] sm:$0xff]
    %s179 = sld [smem:[#allocation4 + $0x4]]
    %v180 = vstv %s179
    %v181 = vmul.f32 %v180, %v177
    %v182 = vmul.f32 %v180, %v178
    %v183 = vadd.f32 %v162, %v181
    %v184 = vadd.f32 %v163, %v182
    %s185 = sld [smem:[#allocation4 + $0xd]]
    %v186 = vstv %s185
    %v187 = vmul.f32 %v186, %v177
    %v188 = vmul.f32 %v186, %v178
    %v189 = vadd.f32 %v168, %v187
    %v190 = vadd.f32 %v169, %v188
    %s191 = sld [smem:[#allocation4 + $0x16]]
    %v192 = vstv %s191
    %v193 = vmul.f32 %v192, %v177
    %v194 = vmul.f32 %v192, %v178
    %v195 = vadd.f32 %v174, %v193
    %v196 = vadd.f32 %v175, %v194
    %s197 = sld [smem:[#allocation4 + $0x5]]
    %v198 = vstv %s197
    %v199 = vmul.f32 %v198, %v156
    %v200 = vmul.f32 %v198, %v157
    %203 = vrot.lane.b32.xlu0 %v199, 127
    %v204 = vpop.permute.xlu0 %203
    %205 = vrot.lane.b32.xlu0 %v200, 127
    %v206 = vpop.permute.xlu0 %205
    %v209 = vadd.f32 %v183, %v204
    %v210 = vadd.f32 %v184, %v206
    %s211 = sld [smem:[#allocation4 + $0xe]]
    %v212 = vstv %s211
    %v213 = vmul.f32 %v212, %v156
    %v214 = vmul.f32 %v212, %v157
    %217 = vrot.lane.b32.xlu0 %v213, 127
    %v218 = vpop.permute.xlu0 %217
    %219 = vrot.lane.b32.xlu0 %v214, 127
    %v220 = vpop.permute.xlu0 %219
    %v223 = vadd.f32 %v189, %v218
    %v224 = vadd.f32 %v190, %v220
    %s225 = sld [smem:[#allocation4 + $0x17]]
    %v226 = vstv %s225
    %v227 = vmul.f32 %v226, %v156
    %v228 = vmul.f32 %v226, %v157
    %231 = vrot.lane.b32.xlu0 %v227, 127
    %v232 = vpop.permute.xlu0 %231
    %233 = vrot.lane.b32.xlu0 %v228, 127
    %v234 = vpop.permute.xlu0 %233
    %v237 = vadd.f32 %v195, %v232
    %v238 = vadd.f32 %v196, %v234
    %v239 = vld [vmem:[%s0 + $0x1] sm:$0xff]
    %v240 = vld [vmem:[%s0 + $0x11] sm:$0xff]
    %s241 = sld [smem:[#allocation4 + $0x6]]
    %v242 = vstv %s241
    %v243 = vmul.f32 %v242, %v239
    %v244 = vmul.f32 %v242, %v240
    %v245 = vadd.f32 %v209, %v243
    %v246 = vadd.f32 %v210, %v244
    %s247 = sld [smem:[#allocation4 + $0xf]]
    %v248 = vstv %s247
    %v249 = vmul.f32 %v248, %v239
    %v250 = vmul.f32 %v248, %v240
    %v251 = vadd.f32 %v223, %v249
    %v252 = vadd.f32 %v224, %v250
    %s253 = sld [smem:[#allocation4 + $0x18]]
    %v254 = vstv %s253
    %v255 = vmul.f32 %v254, %v239
    %v256 = vmul.f32 %v254, %v240
    %v257 = vadd.f32 %v237, %v255
    %v258 = vadd.f32 %v238, %v256
    %v259 = vld [vmem:[%s92 + $0x1] sm:$0xff]
    %v260 = vld [vmem:[%s92 + $0x11] sm:$0xff]
    %s261 = sld [smem:[#allocation4 + $0x7]]
    %v262 = vstv %s261
    %v263 = vmul.f32 %v262, %v259
    %v264 = vmul.f32 %v262, %v260
    %v265 = vadd.f32 %v245, %v263
    %v266 = vadd.f32 %v246, %v264
    %s267 = sld [smem:[#allocation4 + $0x10]]
    %v268 = vstv %s267
    %v269 = vmul.f32 %v268, %v259
    %v270 = vmul.f32 %v268, %v260
    %v271 = vadd.f32 %v251, %v269
    %v272 = vadd.f32 %v252, %v270
    %s273 = sld [smem:[#allocation4 + $0x19]]
    %v274 = vstv %s273
    %v275 = vmul.f32 %v274, %v259
    %v276 = vmul.f32 %v274, %v260
    %v277 = vadd.f32 %v257, %v275
    %v278 = vadd.f32 %v258, %v276
    %s279 = sld [smem:[#allocation4 + $0x8]]
    %v280 = vstv %s279
    %v281 = vmul.f32 %v280, %v239
    %v282 = vmul.f32 %v280, %v240
    %285 = vrot.lane.b32.xlu0 %v281, 127
    %v286 = vpop.permute.xlu0 %285
    %287 = vrot.lane.b32.xlu0 %v282, 127
    %v288 = vpop.permute.xlu0 %287
    %v291 = vadd.f32 %v265, %v286
    %v292 = vadd.f32 %v266, %v288
    %s293 = sld [smem:[#allocation4 + $0x11]]
    %v294 = vstv %s293
    %v295 = vmul.f32 %v294, %v239
    %v296 = vmul.f32 %v294, %v240
    %299 = vrot.lane.b32.xlu0 %v295, 127
    %v300 = vpop.permute.xlu0 %299
    %301 = vrot.lane.b32.xlu0 %v296, 127
    %v302 = vpop.permute.xlu0 %301
    %v305 = vadd.f32 %v271, %v300
    %v306 = vadd.f32 %v272, %v302
    %s307 = sld [smem:[#allocation4 + $0x1a]]
    %v308 = vstv %s307
    %v309 = vmul.f32 %v308, %v239
    %v310 = vmul.f32 %v308, %v240
    %313 = vrot.lane.b32.xlu0 %v309, 127
    %v314 = vpop.permute.xlu0 %313
    %315 = vrot.lane.b32.xlu0 %v310, 127
    %v316 = vpop.permute.xlu0 %315
    %v319 = vadd.f32 %v277, %v314
    %v320 = vadd.f32 %v278, %v316
    %s321 = sld [smem:[#allocation6]]
    %v322 = vstv %s321
    %v323 = vadd.f32 %v291, %v322
    %v324 = vadd.f32 %v292, %v322
    %v325 = vmax.f32 %v323, 0.0
    %v326 = vmax.f32 %v324, 0.0
    %vm327 = vcmask 64512
    %v328 = vsel %vm327, %v325, 0.0
    %329 = vadd.xlane.f32.xlu0 %v328
    %v330 = vpop.xlane.xlu0 %329
    %v331 = vsel %vm327, %v326, 0.0
    %332 = vadd.xlane.f32.xlu0 %v331
    %v333 = vpop.xlane.xlu0 %332
    %v334 = vld [vmem:[#allocation2] sm:$0x3]
    %v337 = vlaneseq
    %v338 = vand.u32 %v337, 127
    %v339 = vperm.slane %v330, %v338
    %v340 = vperm.slane %v333, %v338
    %vm341 = vcmask 1041409
    %v342 = vsel %vm341, %v340, %v339
    %vm344 = vcmask 58368
    %v345 = vsel %vm344, %v342, 0.0
    %346 = vadd.xlane.f32.xlu0 %v345
    %v347 = vpop.xlane.xlu0 %346
    %v348 = vadd.f32 %v334, %v347
    %vm349 = vcmask 1024
    %350 = vst.msk [vmem:[#allocation2] sm:$0x3] %vm349, %v348
    %s351 = sld [smem:[#allocation6 + $0x1]]
    %v352 = vstv %s351
    %v353 = vadd.f32 %v305, %v352
    %v354 = vadd.f32 %v306, %v352
    %v355 = vmax.f32 %v353, 0.0
    %v356 = vmax.f32 %v354, 0.0
    %v357 = vsel %vm327, %v355, 0.0
    %358 = vadd.xlane.f32.xlu0 %v357
    %v359 = vpop.xlane.xlu0 %358
    %v360 = vsel %vm327, %v356, 0.0
    %361 = vadd.xlane.f32.xlu0 %v360
    %v362 = vpop.xlane.xlu0 %361
    %s363 = scalar_lea.vmem [#allocation2], 2
    %v364 = vld [vmem:[%s363] sm:$0x3]
    %v367 = vperm.slane %v359, %v338
    %v368 = vperm.slane %v362, %v338
    %v369 = vsel %vm341, %v368, %v367
    %v371 = vsel %vm344, %v369, 0.0
    %372 = vadd.xlane.f32.xlu0 %v371
    %v373 = vpop.xlane.xlu0 %372
    %v374 = vadd.f32 %v364, %v373
    %375 = vst.msk [vmem:[%s363] sm:$0x3] %vm349, %v374
    %s376 = sld [smem:[#allocation6 + $0x2]]
    %v377 = vstv %s376
    %v378 = vadd.f32 %v319, %v377
    %v379 = vadd.f32 %v320, %v377
    %v380 = vmax.f32 %v378, 0.0
    %v381 = vmax.f32 %v379, 0.0
    %v382 = vsel %vm327, %v380, 0.0
    %383 = vadd.xlane.f32.xlu0 %v382
    %v384 = vpop.xlane.xlu0 %383
    %v385 = vsel %vm327, %v381, 0.0
    %386 = vadd.xlane.f32.xlu0 %v385
    %v387 = vpop.xlane.xlu0 %386
    %s388 = scalar_lea.vmem [#allocation2], 4
    %v389 = vld [vmem:[%s388] sm:$0x3]
    %v392 = vperm.slane %v384, %v338
    %v393 = vperm.slane %v387, %v338
    %v394 = vsel %vm341, %v393, %v392
    %v396 = vsel %vm344, %v394, 0.0
    %397 = vadd.xlane.f32.xlu0 %v396
    %v398 = vpop.xlane.xlu0 %397
    %v399 = vadd.f32 %v389, %v398
    %400 = vst.msk [vmem:[%s388] sm:$0x3] %vm349, %v399
    // Predicated region
    $region66: #{model_forward.1} parent=1 // pred_check
      %p401 = pneg %p70
    $region67: #{model_forward.1} parent=1 // pred_check_branch
      %403 = sbr.rel (%p401) target = $region69
    $region68: #{model_forward.1} parent=1 // pred_region
      %v404 = vld [vmem:[#allocation2] sm:$0x3]
      %v405 = vmul.f32 %v404, 0.015625
      %v406 = vld [vmem:[%s363] sm:$0x3]
      %v407 = vmul.f32 %v406, 0.015625
      %v408 = vld [vmem:[%s388] sm:$0x3]
      %v409 = vmul.f32 %v408, 0.015625
      %v410 = vld [vmem:[%s6] sm:$0xf]
      %v411 = vld [vmem:[%s5] ss:$4 sm:$0xf]
      %413 = vset.pattern.permute.xlu0 0
      %414 = vperm.xlu0 %413, %v405
      %v415 = vpop.permute.xlu0 %414
      %v418 = vperm.slane %v411, 0
      %v419 = vperm.slane %v411, 1
      %v420 = vperm.slane %v411, 2
      %v421 = vperm.slane %v411, 3
      %v426 = vmul.f32 %v415, %v418
      %v427 = vmul.f32 %v415, %v419
      %v428 = vmul.f32 %v415, %v420
      %v429 = vmul.f32 %v415, %v421
      %v431 = vperm.slane %v410, 0
      %v432 = vperm.slane %v410, 1
      %v433 = vperm.slane %v410, 2
      %v434 = vperm.slane %v410, 3
      %v439 = vadd.f32 %v431, %v426
      %v440 = vadd.f32 %v432, %v427
      %v441 = vadd.f32 %v433, %v428
      %v442 = vadd.f32 %v434, %v429
      %s443 = scalar_lea.vmem %s5, 1
      %v444 = vld [vmem:[%s443] ss:$4 sm:$0xf]
      %446 = vset.pattern.permute.xlu0 0
      %447 = vperm.xlu0 %446, %v407
      %v448 = vpop.permute.xlu0 %447
      %v451 = vperm.slane %v444, 0
      %v452 = vperm.slane %v444, 1
      %v453 = vperm.slane %v444, 2
      %v454 = vperm.slane %v444, 3
      %v459 = vmul.f32 %v448, %v451
      %v460 = vmul.f32 %v448, %v452
      %v461 = vmul.f32 %v448, %v453
      %v462 = vmul.f32 %v448, %v454
      %v463 = vadd.f32 %v439, %v459
      %v464 = vadd.f32 %v440, %v460
      %v465 = vadd.f32 %v441, %v461
      %v466 = vadd.f32 %v442, %v462
      %s467 = scalar_lea.vmem %s5, 2
      %v468 = vld [vmem:[%s467] ss:$4 sm:$0xf]
      %470 = vset.pattern.permute.xlu0 0
      %471 = vperm.xlu0 %470, %v409
      %v472 = vpop.permute.xlu0 %471
      %v475 = vperm.slane %v468, 0
      %v476 = vperm.slane %v468, 1
      %v477 = vperm.slane %v468, 2
      %v478 = vperm.slane %v468, 3
      %v483 = vmul.f32 %v472, %v475
      %v484 = vmul.f32 %v472, %v476
      %v485 = vmul.f32 %v472, %v477
      %v486 = vmul.f32 %v472, %v478
      %v487 = vadd.f32 %v463, %v483
      %v488 = vadd.f32 %v464, %v484
      %v489 = vadd.f32 %v465, %v485
      %v490 = vadd.f32 %v466, %v486
      %v491 = vld [vmem:[%s8] sm:$0xf]
      %v492 = vld [vmem:[%s1] sm:$0x3]
      %v493 = vld [vmem:[%s7] ss:$4 sm:$0xf]
      %495 = vset.pattern.permute.xlu0 0
      %496 = vperm.xlu0 %495, %v492
      %v497 = vpop.permute.xlu0 %496
      %v500 = vperm.slane %v493, 0
      %v501 = vperm.slane %v493, 1
      %v502 = vperm.slane %v493, 2
      %v503 = vperm.slane %v493, 3
      %v508 = vmul.f32 %v497, %v500
      %v509 = vmul.f32 %v497, %v501
      %v510 = vmul.f32 %v497, %v502
      %v511 = vmul.f32 %v497, %v503
      %v513 = vperm.slane %v491, 0
      %v514 = vperm.slane %v491, 1
      %v515 = vperm.slane %v491, 2
      %v516 = vperm.slane %v491, 3
      %v521 = vadd.f32 %v513, %v508
      %v522 = vadd.f32 %v514, %v509
      %v523 = vadd.f32 %v515, %v510
      %v524 = vadd.f32 %v516, %v511
      %s525 = scalar_lea.vmem %s7, 1
      %v526 = vld [vmem:[%s525] ss:$4 sm:$0xf]
      %527 = vset.pattern.permute.xlu0 1
      %528 = vperm.xlu0 %527, %v492
      %v529 = vpop.permute.xlu0 %528
      %v532 = vperm.slane %v526, 0
      %v533 = vperm.slane %v526, 1
      %v534 = vperm.slane %v526, 2
      %v535 = vperm.slane %v526, 3
      %v540 = vmul.f32 %v529, %v532
      %v541 = vmul.f32 %v529, %v533
      %v542 = vmul.f32 %v529, %v534
      %v543 = vmul.f32 %v529, %v535
      %v544 = vadd.f32 %v521, %v540
      %v545 = vadd.f32 %v522, %v541
      %v546 = vadd.f32 %v523, %v542
      %v547 = vadd.f32 %v524, %v543
      %s548 = scalar_lea.vmem %s7, 2
      %v549 = vld [vmem:[%s548] ss:$4 sm:$0xf]
      %550 = vset.pattern.permute.xlu0 2
      %551 = vperm.xlu0 %550, %v492
      %v552 = vpop.permute.xlu0 %551
      %v555 = vperm.slane %v549, 0
      %v556 = vperm.slane %v549, 1
      %v557 = vperm.slane %v549, 2
      %v558 = vperm.slane %v549, 3
      %v563 = vmul.f32 %v552, %v555
      %v564 = vmul.f32 %v552, %v556
      %v565 = vmul.f32 %v552, %v557
      %v566 = vmul.f32 %v552, %v558
      %v567 = vadd.f32 %v544, %v563
      %v568 = vadd.f32 %v545, %v564
      %v569 = vadd.f32 %v546, %v565
      %v570 = vadd.f32 %v547, %v566
      %s571 = scalar_lea.vmem %s7, 3
      %v572 = vld [vmem:[%s571] ss:$4 sm:$0xf]
      %573 = vset.pattern.permute.xlu0 3
      %574 = vperm.xlu0 %573, %v492
      %v575 = vpop.permute.xlu0 %574
      %v578 = vperm.slane %v572, 0
      %v579 = vperm.slane %v572, 1
      %v580 = vperm.slane %v572, 2
      %v581 = vperm.slane %v572, 3
      %v586 = vmul.f32 %v575, %v578
      %v587 = vmul.f32 %v575, %v579
      %v588 = vmul.f32 %v575, %v580
      %v589 = vmul.f32 %v575, %v581
      %v590 = vadd.f32 %v567, %v586
      %v591 = vadd.f32 %v568, %v587
      %v592 = vadd.f32 %v569, %v588
      %v593 = vadd.f32 %v570, %v589
      %v594 = vmax.f32 %v590, 0.0
      %v595 = vmax.f32 %v591, 0.0
      %v596 = vmax.f32 %v592, 0.0
      %v597 = vmax.f32 %v593, 0.0
      %v598 = vld [vmem:[%s9] sm:$0xff]
      %v599 = vld [vmem:[%s9 + $0x8] sm:$0xff]
      %v600 = vld [vmem:[%s9 + $0x10] sm:$0xff]
      %v601 = vld [vmem:[%s9 + $0x18] sm:$0xff]
      %v602 = vld [vmem:[%s9 + $0x20] sm:$0xff]
      %v603 = vld [vmem:[%s9 + $0x28] sm:$0xff]
      %v604 = vld [vmem:[%s9 + $0x30] sm:$0xff]
      %v605 = vld [vmem:[%s9 + $0x38] sm:$0xff]
      %v606 = vld [vmem:[%s9 + $0x40] sm:$0xff]
      %v607 = vld [vmem:[%s9 + $0x48] sm:$0xff]
      %v608 = vld [vmem:[%s9 + $0x50] sm:$0xff]
      %v609 = vld [vmem:[%s9 + $0x58] sm:$0xff]
      %v610 = vld [vmem:[%s9 + $0x60] sm:$0xff]
      %v611 = vld [vmem:[%s9 + $0x68] sm:$0xff]
      %v612 = vld [vmem:[%s9 + $0x70] sm:$0xff]
      %v613 = vld [vmem:[%s9 + $0x78] sm:$0xff]
      %v614 = vld [vmem:[%s9 + $0x80] sm:$0xff]
      %v615 = vld [vmem:[%s9 + $0x88] sm:$0xff]
      %v616 = vld [vmem:[%s9 + $0x90] sm:$0xff]
      %v617 = vld [vmem:[%s9 + $0x98] sm:$0xff]
      %v618 = vld [vmem:[%s9 + $0xa0] sm:$0xff]
      %v619 = vld [vmem:[%s9 + $0xa8] sm:$0xff]
      %v620 = vld [vmem:[%s9 + $0xb0] sm:$0xff]
      %v621 = vld [vmem:[%s9 + $0xb8] sm:$0xff]
      %v622 = vld [vmem:[%s9 + $0xc0] sm:$0xff]
      %v623 = vld [vmem:[%s9 + $0xc8] sm:$0xff]
      %v624 = vld [vmem:[%s9 + $0xd0] sm:$0xff]
      %v625 = vld [vmem:[%s9 + $0xd8] sm:$0xff]
      %v626 = vld [vmem:[%s9 + $0xe0] sm:$0xff]
      %v627 = vld [vmem:[%s9 + $0xe8] sm:$0xff]
      %v628 = vld [vmem:[%s9 + $0xf0] sm:$0xff]
      %v629 = vld [vmem:[%s9 + $0xf8] sm:$0xff]
      %v630 = vld [vmem:[%s9 + $0x100] sm:$0xff]
      %v631 = vld [vmem:[%s9 + $0x108] sm:$0xff]
      %v632 = vld [vmem:[%s9 + $0x110] sm:$0xff]
      %v633 = vld [vmem:[%s9 + $0x118] sm:$0xff]
      %v634 = vld [vmem:[%s9 + $0x120] sm:$0xff]
      %v635 = vld [vmem:[%s9 + $0x128] sm:$0xff]
      %v636 = vld [vmem:[%s9 + $0x130] sm:$0xff]
      %v637 = vld [vmem:[%s9 + $0x138] sm:$0xff]
      %v638 = vld [vmem:[%s9 + $0x140] sm:$0xff]
      %v639 = vld [vmem:[%s9 + $0x148] sm:$0xff]
      %v640 = vld [vmem:[%s9 + $0x150] sm:$0xff]
      %v641 = vld [vmem:[%s9 + $0x158] sm:$0xff]
      %v642 = vld [vmem:[%s9 + $0x160] sm:$0xff]
      %v643 = vld [vmem:[%s9 + $0x168] sm:$0xff]
      %v644 = vld [vmem:[%s9 + $0x170] sm:$0xff]
      %v645 = vld [vmem:[%s9 + $0x178] sm:$0xff]
      %v646 = vld [vmem:[%s9 + $0x180] sm:$0xff]
      %v647 = vld [vmem:[%s9 + $0x188] sm:$0xff]
      %v648 = vld [vmem:[%s9 + $0x190] sm:$0xff]
      %v649 = vld [vmem:[%s9 + $0x198] sm:$0xff]
      %v650 = vld [vmem:[%s9 + $0x1a0] sm:$0xff]
      %v651 = vld [vmem:[%s9 + $0x1a8] sm:$0xff]
      %v652 = vld [vmem:[%s9 + $0x1b0] sm:$0xff]
      %v653 = vld [vmem:[%s9 + $0x1b8] sm:$0xff]
      %v654 = vld [vmem:[%s9 + $0x1c0] sm:$0xff]
      %v655 = vld [vmem:[%s9 + $0x1c8] sm:$0xff]
      %v656 = vld [vmem:[%s9 + $0x1d0] sm:$0xff]
      %v657 = vld [vmem:[%s9 + $0x1d8] sm:$0xff]
      %v658 = vld [vmem:[%s9 + $0x1e0] sm:$0xff]
      %v659 = vld [vmem:[%s9 + $0x1e8] sm:$0xff]
      %v660 = vld [vmem:[%s9 + $0x1f0] sm:$0xff]
      %v661 = vld [vmem:[%s9 + $0x1f8] sm:$0xff]
      %v662 = vld [vmem:[%s9 + $0x200] sm:$0xff]
      %v663 = vld [vmem:[%s9 + $0x208] sm:$0xff]
      %v664 = vld [vmem:[%s9 + $0x210] sm:$0xff]
      %v665 = vld [vmem:[%s9 + $0x218] sm:$0xff]
      %v666 = vld [vmem:[%s9 + $0x220] sm:$0xff]
      %v667 = vld [vmem:[%s9 + $0x228] sm:$0xff]
      %v668 = vld [vmem:[%s9 + $0x230] sm:$0xff]
      %v669 = vld [vmem:[%s9 + $0x238] sm:$0xff]
      %v670 = vld [vmem:[%s9 + $0x240] sm:$0xff]
      %v671 = vld [vmem:[%s9 + $0x248] sm:$0xff]
      %v672 = vld [vmem:[%s9 + $0x250] sm:$0xff]
      %v673 = vld [vmem:[%s9 + $0x258] sm:$0xff]
      %v674 = vld [vmem:[%s9 + $0x260] sm:$0xff]
      %v675 = vld [vmem:[%s9 + $0x268] sm:$0xff]
      %v676 = vld [vmem:[%s9 + $0x270] sm:$0xff]
      %v677 = vld [vmem:[%s9 + $0x278] sm:$0xff]
      %v678 = vld [vmem:[%s9 + $0x280] sm:$0xff]
      %v679 = vld [vmem:[%s9 + $0x288] sm:$0xff]
      %v680 = vld [vmem:[%s9 + $0x290] sm:$0xff]
      %v681 = vld [vmem:[%s9 + $0x298] sm:$0xff]
      %v682 = vld [vmem:[%s9 + $0x2a0] sm:$0xff]
      %v683 = vld [vmem:[%s9 + $0x2a8] sm:$0xff]
      %v684 = vld [vmem:[%s9 + $0x2b0] sm:$0xff]
      %v685 = vld [vmem:[%s9 + $0x2b8] sm:$0xff]
      %v686 = vld [vmem:[%s9 + $0x2c0] sm:$0xff]
      %v687 = vld [vmem:[%s9 + $0x2c8] sm:$0xff]
      %v688 = vld [vmem:[%s9 + $0x2d0] sm:$0xff]
      %v689 = vld [vmem:[%s9 + $0x2d8] sm:$0xff]
      %v690 = vld [vmem:[%s9 + $0x2e0] sm:$0xff]
      %v691 = vld [vmem:[%s9 + $0x2e8] sm:$0xff]
      %v692 = vld [vmem:[%s9 + $0x2f0] sm:$0xff]
      %v693 = vld [vmem:[%s9 + $0x2f8] sm:$0xff]
      %v694 = vld [vmem:[%s9 + $0x300] sm:$0xff]
      %v695 = vld [vmem:[%s9 + $0x308] sm:$0xff]
      %v696 = vld [vmem:[%s9 + $0x310] sm:$0xff]
      %v697 = vld [vmem:[%s9 + $0x318] sm:$0xff]
      %v698 = vld [vmem:[%s9 + $0x320] sm:$0xff]
      %v699 = vld [vmem:[%s9 + $0x328] sm:$0xff]
      %v700 = vld [vmem:[%s9 + $0x330] sm:$0xff]
      %v701 = vld [vmem:[%s9 + $0x338] sm:$0xff]
      %v702 = vld [vmem:[%s9 + $0x340] sm:$0xff]
      %v703 = vld [vmem:[%s9 + $0x348] sm:$0xff]
      %v704 = vld [vmem:[%s9 + $0x350] sm:$0xff]
      %v705 = vld [vmem:[%s9 + $0x358] sm:$0xff]
      %v706 = vld [vmem:[%s9 + $0x360] sm:$0xff]
      %v707 = vld [vmem:[%s9 + $0x368] sm:$0xff]
      %v708 = vld [vmem:[%s9 + $0x370] sm:$0xff]
      %v709 = vld [vmem:[%s9 + $0x378] sm:$0xff]
      %v710 = vld [vmem:[%s9 + $0x380] sm:$0xff]
      %v711 = vld [vmem:[%s9 + $0x388] sm:$0xff]
      %v712 = vld [vmem:[%s9 + $0x390] sm:$0xff]
      %v713 = vld [vmem:[%s9 + $0x398] sm:$0xff]
      %v714 = vld [vmem:[%s9 + $0x3a0] sm:$0xff]
      %v715 = vld [vmem:[%s9 + $0x3a8] sm:$0xff]
      %v716 = vld [vmem:[%s9 + $0x3b0] sm:$0xff]
      %v717 = vld [vmem:[%s9 + $0x3b8] sm:$0xff]
      %v718 = vld [vmem:[%s9 + $0x3c0] sm:$0xff]
      %v719 = vld [vmem:[%s9 + $0x3c8] sm:$0xff]
      %v720 = vld [vmem:[%s9 + $0x3d0] sm:$0xff]
      %v721 = vld [vmem:[%s9 + $0x3d8] sm:$0xff]
      %v722 = vld [vmem:[%s9 + $0x3e0] sm:$0xff]
      %v723 = vld [vmem:[%s9 + $0x3e8] sm:$0xff]
      %v724 = vld [vmem:[%s9 + $0x3f0] sm:$0xff]
      %v725 = vld [vmem:[%s9 + $0x3f8] sm:$0xff]
      %v726 = vld [vmem:[%s10] sm:$0x3]
      %v728 = vperm.slane %v726, 0
      %v729 = vperm.slane %v726, 1
      %732 = vmatpush.msra.mxu0 %v628
      %733 = vmatpush.msra.mxu0 %v626
      %734 = vmatpush.msra.mxu0 %v624
      %735 = vmatpush.msra.mxu0 %v622
      %736 = vmatpush.msra.mxu0 %v620
      %737 = vmatpush.msra.mxu0 %v618
      %738 = vmatpush.msra.mxu0 %v616
      %739 = vmatpush.msra.mxu0 %v614
      %740 = vmatpush.msra.mxu0 %v612
      %741 = vmatpush.msra.mxu0 %v610
      %742 = vmatpush.msra.mxu0 %v608
      %743 = vmatpush.msra.mxu0 %v606
      %744 = vmatpush.msra.mxu0 %v604
      %745 = vmatpush.msra.mxu0 %v602
      %746 = vmatpush.msra.mxu0 %v600
      %747 = vmatpush.msra.mxu0 %v598
      %748 = vmatmul.f32.gmra.mxu0 %v594
      %v749 = vpop.f32.mrf.mxu0
      %v750 = vadd.f32 %v728, %v749
      %751 = vdwg.mxu0
      %752 = vmatpush.msra.mxu0 %v660
      %753 = vmatpush.msra.mxu0 %v658
      %754 = vmatpush.msra.mxu0 %v656
      %755 = vmatpush.msra.mxu0 %v654
      %756 = vmatpush.msra.mxu0 %v652
      %757 = vmatpush.msra.mxu0 %v650
      %758 = vmatpush.msra.mxu0 %v648
      %759 = vmatpush.msra.mxu0 %v646
      %760 = vmatpush.msra.mxu0 %v644
      %761 = vmatpush.msra.mxu0 %v642
      %762 = vmatpush.msra.mxu0 %v640
      %763 = vmatpush.msra.mxu0 %v638
      %764 = vmatpush.msra.mxu0 %v636
      %765 = vmatpush.msra.mxu0 %v634
      %766 = vmatpush.msra.mxu0 %v632
      %767 = vmatpush.msra.mxu0 %v630
      %768 = vmatmul.f32.gmra.mxu0 %v595
      %v769 = vpop.f32.mrf.mxu0
      %v770 = vadd.f32 %v750, %v769
      %771 = vdwg.mxu0
      %772 = vmatpush.msra.mxu0 %v692
      %773 = vmatpush.msra.mxu0 %v690
      %774 = vmatpush.msra.mxu0 %v688
      %775 = vmatpush.msra.mxu0 %v686
      %776 = vmatpush.msra.mxu0 %v684
      %777 = vmatpush.msra.mxu0 %v682
      %778 = vmatpush.msra.mxu0 %v680
      %779 = vmatpush.msra.mxu0 %v678
      %780 = vmatpush.msra.mxu0 %v676
      %781 = vmatpush.msra.mxu0 %v674
      %782 = vmatpush.msra.mxu0 %v672
      %783 = vmatpush.msra.mxu0 %v670
      %784 = vmatpush.msra.mxu0 %v668
      %785 = vmatpush.msra.mxu0 %v666
      %786 = vmatpush.msra.mxu0 %v664
      %787 = vmatpush.msra.mxu0 %v662
      %788 = vmatmul.f32.gmra.mxu0 %v596
      %v789 = vpop.f32.mrf.mxu0
      %v790 = vadd.f32 %v770, %v789
      %791 = vdwg.mxu0
      %792 = vmatpush.msra.mxu0 %v724
      %793 = vmatpush.msra.mxu0 %v722
      %794 = vmatpush.msra.mxu0 %v720
      %795 = vmatpush.msra.mxu0 %v718
      %796 = vmatpush.msra.mxu0 %v716
      %797 = vmatpush.msra.mxu0 %v714
      %798 = vmatpush.msra.mxu0 %v712
      %799 = vmatpush.msra.mxu0 %v710
      %800 = vmatpush.msra.mxu0 %v708
      %801 = vmatpush.msra.mxu0 %v706
      %802 = vmatpush.msra.mxu0 %v704
      %803 = vmatpush.msra.mxu0 %v702
      %804 = vmatpush.msra.mxu0 %v700
      %805 = vmatpush.msra.mxu0 %v698
      %806 = vmatpush.msra.mxu0 %v696
      %807 = vmatpush.msra.mxu0 %v694
      %808 = vmatmul.f32.gmra.mxu0 %v597
      %v809 = vpop.f32.mrf.mxu0
      %v810 = vadd.f32 %v790, %v809
      %811 = vdwg.mxu0
      %812 = vmatpush.msra.mxu0 %v629
      %813 = vmatpush.msra.mxu0 %v627
      %814 = vmatpush.msra.mxu0 %v625
      %815 = vmatpush.msra.mxu0 %v623
      %816 = vmatpush.msra.mxu0 %v621
      %817 = vmatpush.msra.mxu0 %v619
      %818 = vmatpush.msra.mxu0 %v617
      %819 = vmatpush.msra.mxu0 %v615
      %820 = vmatpush.msra.mxu0 %v613
      %821 = vmatpush.msra.mxu0 %v611
      %822 = vmatpush.msra.mxu0 %v609
      %823 = vmatpush.msra.mxu0 %v607
      %824 = vmatpush.msra.mxu0 %v605
      %825 = vmatpush.msra.mxu0 %v603
      %826 = vmatpush.msra.mxu0 %v601
      %827 = vmatpush.msra.mxu0 %v599
      %828 = vmatmul.f32.gmra.mxu0 %v594
      %v829 = vpop.f32.mrf.mxu0
      %v830 = vadd.f32 %v729, %v829
      %831 = vdwg.mxu0
      %832 = vmatpush.msra.mxu0 %v661
      %833 = vmatpush.msra.mxu0 %v659
      %834 = vmatpush.msra.mxu0 %v657
      %835 = vmatpush.msra.mxu0 %v655
      %836 = vmatpush.msra.mxu0 %v653
      %837 = vmatpush.msra.mxu0 %v651
      %838 = vmatpush.msra.mxu0 %v649
      %839 = vmatpush.msra.mxu0 %v647
      %840 = vmatpush.msra.mxu0 %v645
      %841 = vmatpush.msra.mxu0 %v643
      %842 = vmatpush.msra.mxu0 %v641
      %843 = vmatpush.msra.mxu0 %v639
      %844 = vmatpush.msra.mxu0 %v637
      %845 = vmatpush.msra.mxu0 %v635
      %846 = vmatpush.msra.mxu0 %v633
      %847 = vmatpush.msra.mxu0 %v631
      %848 = vmatmul.f32.gmra.mxu0 %v595
      %v849 = vpop.f32.mrf.mxu0
      %v850 = vadd.f32 %v830, %v849
      %851 = vdwg.mxu0
      %852 = vmatpush.msra.mxu0 %v693
      %853 = vmatpush.msra.mxu0 %v691
      %854 = vmatpush.msra.mxu0 %v689
      %855 = vmatpush.msra.mxu0 %v687
      %856 = vmatpush.msra.mxu0 %v685
      %857 = vmatpush.msra.mxu0 %v683
      %858 = vmatpush.msra.mxu0 %v681
      %859 = vmatpush.msra.mxu0 %v679
      %860 = vmatpush.msra.mxu0 %v677
      %861 = vmatpush.msra.mxu0 %v675
      %862 = vmatpush.msra.mxu0 %v673
      %863 = vmatpush.msra.mxu0 %v671
      %864 = vmatpush.msra.mxu0 %v669
      %865 = vmatpush.msra.mxu0 %v667
      %866 = vmatpush.msra.mxu0 %v665
      %867 = vmatpush.msra.mxu0 %v663
      %868 = vmatmul.f32.gmra.mxu0 %v596
      %v869 = vpop.f32.mrf.mxu0
      %v870 = vadd.f32 %v850, %v869
      %871 = vdwg.mxu0
      %872 = vmatpush.msra.mxu0 %v725
      %873 = vmatpush.msra.mxu0 %v723
      %874 = vmatpush.msra.mxu0 %v721
      %875 = vmatpush.msra.mxu0 %v719
      %876 = vmatpush.msra.mxu0 %v717
      %877 = vmatpush.msra.mxu0 %v715
      %878 = vmatpush.msra.mxu0 %v713
      %879 = vmatpush.msra.mxu0 %v711
      %880 = vmatpush.msra.mxu0 %v709
      %881 = vmatpush.msra.mxu0 %v707
      %882 = vmatpush.msra.mxu0 %v705
      %883 = vmatpush.msra.mxu0 %v703
      %884 = vmatpush.msra.mxu0 %v701
      %885 = vmatpush.msra.mxu0 %v699
      %886 = vmatpush.msra.mxu0 %v697
      %887 = vmatpush.msra.mxu0 %v695
      %888 = vmatmul.f32.gmra.mxu0 %v597
      %v889 = vpop.f32.mrf.mxu0
      %v890 = vadd.f32 %v870, %v889
      %891 = vdwg.mxu0
      %v892 = vmax.f32 %v810, 0.0
      %v893 = vmax.f32 %v890, 0.0
      %v894 = vld [vmem:[%s11] sm:$0xf]
      %v896 = vperm.slane %v894, 0
      %v897 = vperm.slane %v894, 1
      %v898 = vperm.slane %v894, 2
      %v899 = vperm.slane %v894, 3
      %v904 = vmul.f32 %v487, %v896
      %v905 = vmul.f32 %v488, %v897
      %v906 = vmul.f32 %v489, %v898
      %v907 = vmul.f32 %v490, %v899
      %vm908 = vcmask 1041408
      %v909 = vsel %vm908, %v904, 0.0
      %v910 = vsel %vm908, %v905, 0.0
      %v911 = vadd.f32 %v909, %v910
      %v912 = vsel %vm908, %v906, 0.0
      %v913 = vadd.f32 %v911, %v912
      %v914 = vsel %vm908, %v907, 0.0
      %v915 = vadd.f32 %v913, %v914
      %916 = vadd.xlane.f32.xlu0 %v915
      %v917 = vpop.xlane.xlu0 %916
      %v918 = vld [vmem:[%s12] sm:$0x3]
      %v920 = vperm.slane %v918, 0
      %v921 = vperm.slane %v918, 1
      %v924 = vmul.f32 %v892, %v920
      %v925 = vmul.f32 %v893, %v921
      %v926 = vsel %vm908, %v924, 0.0
      %v927 = vsel %vm908, %v925, 0.0
      %v928 = vadd.f32 %v926, %v927
      %929 = vadd.xlane.f32.xlu0 %v928
      %v930 = vpop.xlane.xlu0 %929
      %v931 = vadd.f32 %v917, %v930
      %s932 = sld [smem:[#allocation3]]
      %v933 = vstv %s932
      %v934 = vadd.f32 %v931, %v933
      %935 = vst.msk [vmem:[%s13] sm:$0x3] %vm349, %v934
    $region69: #{model_forward.1} parent=1 // pred_fallthru
      _
    // Predicated region
    $region70: #{model_forward.1} parent=1 // pred_check
      _
    $region71: #{model_forward.1} parent=1 // pred_check_branch
      %937 = sbr.rel (0) target = $region73
    $region72: #{model_forward.1} parent=1 // pred_region
      _
    $region73: #{model_forward.1} parent=1 // pred_fallthru
      _
    // Predicated region
    $region74: #{model_forward.1} parent=1 // pred_check
      _
    $region75: #{model_forward.1} parent=1 // pred_check_branch
      %939 = sbr.rel (0) target = $region77
    $region76: #{model_forward.1} parent=1 // pred_region
      _
    $region77: #{model_forward.1} parent=1 // pred_fallthru
      _
    %940 = vsyncpa [#allocation5], 1
    %941 = vsyncpa [#allocation7], 1

</llo_original>
